<compile_context>
chip_gen: v6e
topology: v6e:2x2x1
jax: 0.10.0
libtpu: 0.0.40
codegen_flags: <defaults>
</compile_context>

<pallas_src>
import functools

import jax
import jax.numpy as jnp
from jax.experimental import pallas as pl
from jax.experimental.pallas import tpu as pltpu

EPS = 1e-5  # torch.nn.LayerNorm default


def _round_up(x, m):
    return (x + m - 1) // m * m


def _pad2(a, rows, cols):
    pr, pc = rows - a.shape[0], cols - a.shape[1]
    if pr or pc:
        a = jnp.pad(a, ((0, pr), (0, pc)))
    return a


def _vmem_capacity_bytes():
    try:
        return int(pltpu.get_tpu_info().vmem_capacity_bytes)
    except Exception:
        return 128 << 20  # v5e/v6e default; conservative fallback


def _resident_spec(shape):
    """Full-array, constant-index BlockSpec; single-buffered when supported."""
    index_map = lambda i: tuple(0 for _ in shape)
    try:
        return pl.BlockSpec(shape, index_map, pipeline_mode=pl.Buffered(1))
    except Exception:  # older/interpret paths without pipeline_mode support
        return pl.BlockSpec(shape, index_map)


def _mlp_kernel(x_ref, w1_ref, v1_ref, w2_ref, v2_ref, o_ref, *, inv_h, inv_d):
    # ---- Linear 1: in-kernel f32->bf16 cast, bf16 x bf16 -> f32 on the MXU ----
    x = x_ref[...].astype(jnp.bfloat16)
    b1 = v1_ref[0:1, :]
    g1 = v1_ref[1:2, :]
    be1 = v1_ref[2:3, :]
    h = jnp.dot(x, w1_ref[...], preferred_element_type=jnp.float32) + b1

    # ---- LayerNorm 1 (one-pass stats over the TRUE hidden width; padded
    #      columns of h are exactly zero so the sums are unaffected) ----
    mu = jnp.sum(h, axis=-1, keepdims=True) * inv_h
    var = jnp.maximum(jnp.sum(h * h, axis=-1, keepdims=True) * inv_h - mu * mu, 0.0)
    inv = jax.lax.rsqrt(var + EPS)            # EUP slot
    scale = inv * g1                           # fused affine: one mul + one fma/elem
    shift = be1 - mu * scale
    hn = h * scale + shift                     # padded cols: gamma=beta=0 -> stays 0

    # ---- Linear 2 ----
    b2 = v2_ref[0:1, :]
    g2 = v2_ref[1:2, :]
    be2 = v2_ref[2:3, :]
    y = jnp.dot(hn.astype(jnp.bfloat16), w2_ref[...],
                preferred_element_type=jnp.float32) + b2

    # ---- LayerNorm 2 ----
    mu2 = jnp.sum(y, axis=-1, keepdims=True) * inv_d
    var2 = jnp.maximum(jnp.sum(y * y, axis=-1, keepdims=True) * inv_d - mu2 * mu2, 0.0)
    inv2 = jax.lax.rsqrt(var2 + EPS)
    scale2 = inv2 * g2
    shift2 = be2 - mu2 * scale2
    o_ref[...] = (y * scale2 + shift2).astype(o_ref.dtype)


def prepare_params(params):
    """Pad to lane-dense (128-multiple) feature dims and cast ONCE.

    Linear weights are stored pre-transposed as (in, out) so the kernel computes
    x @ W + b (== torch's x @ weight.T + bias). Returns a dict that can be cached
    and reused across simple_mlp calls (no per-call pad/cast HBM passes).
    """
    D_in, H = params["w1"].shape
    _, D_out = params["w2"].shape
    D_in_p, H_p, D_out_p = (_round_up(d, 128) for d in (D_in, H, D_out))

    w1 = _pad2(params["w1"], D_in_p, H_p).astype(jnp.bfloat16)
    w2 = _pad2(params["w2"], H_p, D_out_p).astype(jnp.bfloat16)
    # Stack (bias, gamma, beta) into one (3, N) f32 array per layer.
    v1 = jnp.concatenate(
        [_pad2(params[k], 1, H_p).astype(jnp.float32) for k in ("b1", "g1", "be1")],
        axis=0)
    v2 = jnp.concatenate(
        [_pad2(params[k], 1, D_out_p).astype(jnp.float32) for k in ("b2", "g2", "be2")],
        axis=0)
    return {"w1": w1, "w2": w2, "v1": v1, "v2": v2,
            "dims": (D_in, H, D_out), "padded_dims": (D_in_p, H_p, D_out_p)}


def simple_mlp(x, prepped, *, block_b=None):
    """x: (B, input_dim) float32. prepped: output of prepare_params()."""
    B, D_in = x.shape
    D_in_t, H, D_out = prepped["dims"]
    D_in_p, H_p, D_out_p = prepped["padded_dims"]
    assert D_in == D_in_t

    # Batch tiling: multiples of 16 (bf16 sublane packing), large tiles, but cap
    # so the "parallel" grid has >=2 steps (v7x has 2 TensorCores per chip).
    if block_b is None:
        block_b = min(_round_up(B, 16), 512)
        if B >= 32:
            block_b = min(block_b, _round_up(pl.cdiv(B, 2), 16))
    assert block_b % 16 == 0
    B_p = _round_up(B, block_b)
    grid = (B_p // block_b,)

    w1, w2, v1, v2 = prepped["w1"], prepped["w2"], prepped["v1"], prepped["v2"]

    # x stays f32 here; cast to bf16 happens inside the kernel (hidden under MXU).
    xp = _pad2(x, B_p, D_in_p)

    out_dtype = x.dtype
    out_itemsize = jnp.dtype(out_dtype).itemsize
    x_itemsize = jnp.dtype(xp.dtype).itemsize

    # --- VMEM budget (generation-aware) ---
    resident = 2 * (w1.size + w2.size) * 2 + 2 * (v1.size + v2.size) * 4  # worst case 2-buf
    streamed = 2 * (block_b * D_in_p * x_itemsize + block_b * D_out_p * out_itemsize)
    live = 6 * block_b * (H_p + D_out_p) * 4          # f32 intermediates (h, hn, y, ...)
    need = resident + streamed + live + (4 << 20)
    cap = _vmem_capacity_bytes()
    ceiling = min(int(0.85 * cap), 100 << 20)
    vmem_limit = int(min(max(need, 16 << 20), ceiling))
    # TODO(synk): if resident weights alone exceed ~0.75*cap (large hidden dims on
    # v7x's 64 MiB VMEM), switch to a 2-D grid that tiles H with a VMEM f32
    # accumulator and pl.when init/finalize instead of fully-resident weights.

    cost = pl.CostEstimate(
        flops=2 * B_p * (D_in_p * H_p + H_p * D_out_p),
        transcendentals=2 * B_p,
        bytes_accessed=int(xp.nbytes + w1.nbytes + w2.nbytes + v1.nbytes + v2.nbytes +
                           B_p * D_out_p * out_itemsize),
    )

    kernel = functools.partial(
        _mlp_kernel,
        inv_h=float(1.0 / H),      # Python floats -> trace-time literals (no capture)
        inv_d=float(1.0 / D_out),
    )

    def row_spec(dim):
        return pl.BlockSpec((block_b, dim), lambda i: (i, 0))

    out_p = pl.pallas_call(
        kernel,
        out_shape=jax.ShapeDtypeStruct((B_p, D_out_p), out_dtype),
        grid_spec=pltpu.PrefetchScalarGridSpec(
            num_scalar_prefetch=0,
            grid=grid,
            in_specs=[
                row_spec(D_in_p),           # x tile (streams, double-buffered)
                _resident_spec(w1.shape),   # W1 (resident, single-buffered)
                _resident_spec(v1.shape),   # [b1; gamma1; beta1]
                _resident_spec(w2.shape),   # W2
                _resident_spec(v2.shape),   # [b2; gamma2; beta2]
            ],
            out_specs=row_spec(D_out_p),    # lane-dense output tile
        ),
        compiler_params=pltpu.CompilerParams(
            dimension_semantics=("parallel",),
            vmem_limit_bytes=vmem_limit,
        ),
        cost_estimate=cost,
    )(xp, w1, v1, w2, v2)

    # Strip batch / feature padding outside the kernel.
    return out_p[:B, :D_out]


def init_params(key, input_dim, hidden_dim, output_dim, dtype=jnp.float32):
    """Synthetic init matching SimpleMLP parameter shapes. Linear weights stored
    transposed (in, out). LayerNorm: gamma=1, beta=0 (torch defaults)."""
    k1, k2, k3, k4 = jax.random.split(key, 4)
    s1 = 1.0 / jnp.sqrt(input_dim)
    s2 = 1.0 / jnp.sqrt(hidden_dim)
    return {
        "w1": jax.random.uniform(k1, (input_dim, hidden_dim), dtype, -s1, s1),
        "b1": jax.random.uniform(k2, (1, hidden_dim), dtype, -s1, s1),
        "g1": jnp.ones((1, hidden_dim), dtype),
        "be1": jnp.zeros((1, hidden_dim), dtype),
        "w2": jax.random.uniform(k3, (hidden_dim, output_dim), dtype, -s2, s2),
        "b2": jax.random.uniform(k4, (1, output_dim), dtype, -s2, s2),
        "g2": jnp.ones((1, output_dim), dtype),
        "be2": jnp.zeros((1, output_dim), dtype),
    }


def _reference(x, p):
    """Reference with the same bf16-operand / f32-accumulate matmuls, two-pass LN."""
    xb = x.astype(jnp.bfloat16)
    w1 = p["w1"].astype(jnp.bfloat16)
    w2 = p["w2"].astype(jnp.bfloat16)
    h = jnp.dot(xb, w1, preferred_element_type=jnp.float32) + p["b1"].astype(jnp.float32)
    mu = h.mean(-1, keepdims=True)
    var = ((h - mu) ** 2).mean(-1, keepdims=True)
    hn = (h - mu) * jax.lax.rsqrt(var + EPS) * p["g1"] + p["be1"]
    y = jnp.dot(hn.astype(jnp.bfloat16), w2,
                preferred_element_type=jnp.float32) + p["b2"].astype(jnp.float32)
    mu2 = y.mean(-1, keepdims=True)
    var2 = ((y - mu2) ** 2).mean(-1, keepdims=True)
    return (y - mu2) * jax.lax.rsqrt(var2 + EPS) * p["g2"] + p["be2"]


if __name__ == "__main__":
    key = jax.random.PRNGKey(0)
    kx, kp = jax.random.split(key)

    # Small shapes that still exercise padding and a multi-step "parallel" grid.
    batch, input_dim, hidden_dim, output_dim = 256, 96, 192, 80
    dtype = jnp.float32

    x = jax.random.normal(kx, (batch, input_dim), dtype)
    params = init_params(kp, input_dim, hidden_dim, output_dim, dtype)

    prepped = prepare_params(params)        # pad/cast once, reuse across calls
    out = simple_mlp(x, prepped)            # block_b=128 -> grid=(2,) parallel steps
    out = jax.block_until_ready(out)

    ref = _reference(x, params)
    assert out.shape == (batch, output_dim)
    assert jnp.allclose(out.astype(jnp.float32), ref.astype(jnp.float32),
                        atol=2e-2, rtol=2e-2), float(jnp.max(jnp.abs(out - ref)))

    print("KERNEL_OK")
</pallas_src>

<mosaic_0001>
module attributes {stable_mosaic.version = 11 : i64} {
  func.func @_mlp_kernel(%arg0: i32, %arg1: memref<128x128xf32, #tpu.memory_space<vmem>>, %arg2: memref<128x256xbf16, #tpu.memory_space<vmem>>, %arg3: memref<3x256xf32, #tpu.memory_space<vmem>>, %arg4: memref<256x128xbf16, #tpu.memory_space<vmem>>, %arg5: memref<3x128xf32, #tpu.memory_space<vmem>>, %arg6: memref<128x128xf32, #tpu.memory_space<vmem>>) attributes {dimension_semantics = [#tpu.dimension_semantics<parallel>], iteration_bounds = array<i64: 2>, scalar_prefetch = 0 : i64, scratch_operands = 0 : i64, tpu.core_type = #tpu.core_type<tc>, window_params = [{transform_indices = @transform_0, window_bounds = array<i64: 128, 128>}, {pipeline_mode = #tpu.pipeline_mode<synchronous>, transform_indices = @transform_1, window_bounds = array<i64: 128, 256>}, {pipeline_mode = #tpu.pipeline_mode<synchronous>, transform_indices = @transform_2, window_bounds = array<i64: 3, 256>}, {pipeline_mode = #tpu.pipeline_mode<synchronous>, transform_indices = @transform_3, window_bounds = array<i64: 256, 128>}, {pipeline_mode = #tpu.pipeline_mode<synchronous>, transform_indices = @transform_4, window_bounds = array<i64: 3, 128>}, {transform_indices = @transform_5, window_bounds = array<i64: 128, 128>}]} {
    %c0 = arith.constant 0 : index
    %c0_0 = arith.constant 0 : index
    %0 = vector.load %arg1[%c0, %c0_0] : memref<128x128xf32, #tpu.memory_space<vmem>>, vector<128x128xf32>
    %1 = arith.truncf %0 : vector<128x128xf32> to vector<128x128xbf16>
    %c0_1 = arith.constant 0 : index
    %c0_2 = arith.constant 0 : index
    %2 = vector.load %arg3[%c0_1, %c0_2] : memref<3x256xf32, #tpu.memory_space<vmem>>, vector<1x256xf32>
    %c1 = arith.constant 1 : index
    %c0_3 = arith.constant 0 : index
    %3 = vector.load %arg3[%c1, %c0_3] : memref<3x256xf32, #tpu.memory_space<vmem>>, vector<1x256xf32>
    %c2 = arith.constant 2 : index
    %c0_4 = arith.constant 0 : index
    %4 = vector.load %arg3[%c2, %c0_4] : memref<3x256xf32, #tpu.memory_space<vmem>>, vector<1x256xf32>
    %c0_5 = arith.constant 0 : index
    %c0_6 = arith.constant 0 : index
    %5 = vector.load %arg2[%c0_5, %c0_6] : memref<128x256xbf16, #tpu.memory_space<vmem>>, vector<128x256xbf16>
    %cst = arith.constant dense<0.000000e+00> : vector<128x256xf32>
    %6 = tpu.matmul %1, %5, %cst {dimension_numbers = #tpu.dot_dimension_numbers<[1], [0], [0], [1], [0, 0, 1, 1], [], []>} : vector<128x128xbf16>, vector<128x256xbf16>, vector<128x256xf32> -> vector<128x256xf32>
    %7 = vector.broadcast %2 : vector<1x256xf32> to vector<128x256xf32>
    %8 = arith.addf %6, %7 : vector<128x256xf32>
    %cst_7 = arith.constant dense<0.000000e+00> : vector<128xf32>
    %9 = vector.multi_reduction <add>, %8, %cst_7 [1] : vector<128x256xf32> to vector<128xf32>
    %10 = vector.shape_cast %9 : vector<128xf32> to vector<128x1xf32>
    %cst_8 = arith.constant 0.00520833349 : f32
    %11 = vector.broadcast %cst_8 : f32 to vector<128x1xf32>
    %12 = arith.mulf %10, %11 : vector<128x1xf32>
    %13 = arith.mulf %8, %8 : vector<128x256xf32>
    %cst_9 = arith.constant dense<0.000000e+00> : vector<128xf32>
    %14 = vector.multi_reduction <add>, %13, %cst_9 [1] : vector<128x256xf32> to vector<128xf32>
    %15 = vector.shape_cast %14 : vector<128xf32> to vector<128x1xf32>
    %cst_10 = arith.constant 0.00520833349 : f32
    %16 = vector.broadcast %cst_10 : f32 to vector<128x1xf32>
    %17 = arith.mulf %15, %16 : vector<128x1xf32>
    %18 = arith.mulf %12, %12 : vector<128x1xf32>
    %19 = arith.subf %17, %18 : vector<128x1xf32>
    %cst_11 = arith.constant 0.000000e+00 : f32
    %20 = vector.broadcast %cst_11 : f32 to vector<128x1xf32>
    %21 = arith.maximumf %19, %20 : vector<128x1xf32>
    %cst_12 = arith.constant 9.99999974E-6 : f32
    %22 = vector.broadcast %cst_12 : f32 to vector<128x1xf32>
    %23 = arith.addf %21, %22 : vector<128x1xf32>
    %24 = math.rsqrt %23 : vector<128x1xf32>
    %25 = vector.broadcast %24 : vector<128x1xf32> to vector<128x256xf32>
    %26 = vector.broadcast %3 : vector<1x256xf32> to vector<128x256xf32>
    %27 = arith.mulf %25, %26 : vector<128x256xf32>
    %28 = vector.broadcast %12 : vector<128x1xf32> to vector<128x256xf32>
    %29 = arith.mulf %28, %27 : vector<128x256xf32>
    %30 = vector.broadcast %4 : vector<1x256xf32> to vector<128x256xf32>
    %31 = arith.subf %30, %29 : vector<128x256xf32>
    %32 = arith.mulf %8, %27 : vector<128x256xf32>
    %33 = arith.addf %32, %31 : vector<128x256xf32>
    %c0_13 = arith.constant 0 : index
    %c0_14 = arith.constant 0 : index
    %34 = vector.load %arg5[%c0_13, %c0_14] : memref<3x128xf32, #tpu.memory_space<vmem>>, vector<1x128xf32>
    %c1_15 = arith.constant 1 : index
    %c0_16 = arith.constant 0 : index
    %35 = vector.load %arg5[%c1_15, %c0_16] : memref<3x128xf32, #tpu.memory_space<vmem>>, vector<1x128xf32>
    %c2_17 = arith.constant 2 : index
    %c0_18 = arith.constant 0 : index
    %36 = vector.load %arg5[%c2_17, %c0_18] : memref<3x128xf32, #tpu.memory_space<vmem>>, vector<1x128xf32>
    %37 = arith.truncf %33 : vector<128x256xf32> to vector<128x256xbf16>
    %c0_19 = arith.constant 0 : index
    %c0_20 = arith.constant 0 : index
    %38 = vector.load %arg4[%c0_19, %c0_20] : memref<256x128xbf16, #tpu.memory_space<vmem>>, vector<256x128xbf16>
    %cst_21 = arith.constant dense<0.000000e+00> : vector<128x128xf32>
    %39 = tpu.matmul %37, %38, %cst_21 {dimension_numbers = #tpu.dot_dimension_numbers<[1], [0], [0], [1], [0, 0, 1, 1], [], []>} : vector<128x256xbf16>, vector<256x128xbf16>, vector<128x128xf32> -> vector<128x128xf32>
    %40 = vector.broadcast %34 : vector<1x128xf32> to vector<128x128xf32>
    %41 = arith.addf %39, %40 : vector<128x128xf32>
    %cst_22 = arith.constant dense<0.000000e+00> : vector<128xf32>
    %42 = vector.multi_reduction <add>, %41, %cst_22 [1] : vector<128x128xf32> to vector<128xf32>
    %43 = vector.shape_cast %42 : vector<128xf32> to vector<128x1xf32>
    %cst_23 = arith.constant 1.250000e-02 : f32
    %44 = vector.broadcast %cst_23 : f32 to vector<128x1xf32>
    %45 = arith.mulf %43, %44 : vector<128x1xf32>
    %46 = arith.mulf %41, %41 : vector<128x128xf32>
    %cst_24 = arith.constant dense<0.000000e+00> : vector<128xf32>
    %47 = vector.multi_reduction <add>, %46, %cst_24 [1] : vector<128x128xf32> to vector<128xf32>
    %48 = vector.shape_cast %47 : vector<128xf32> to vector<128x1xf32>
    %cst_25 = arith.constant 1.250000e-02 : f32
    %49 = vector.broadcast %cst_25 : f32 to vector<128x1xf32>
    %50 = arith.mulf %48, %49 : vector<128x1xf32>
    %51 = arith.mulf %45, %45 : vector<128x1xf32>
    %52 = arith.subf %50, %51 : vector<128x1xf32>
    %cst_26 = arith.constant 0.000000e+00 : f32
    %53 = vector.broadcast %cst_26 : f32 to vector<128x1xf32>
    %54 = arith.maximumf %52, %53 : vector<128x1xf32>
    %cst_27 = arith.constant 9.99999974E-6 : f32
    %55 = vector.broadcast %cst_27 : f32 to vector<128x1xf32>
    %56 = arith.addf %54, %55 : vector<128x1xf32>
    %57 = math.rsqrt %56 : vector<128x1xf32>
    %58 = vector.broadcast %57 : vector<128x1xf32> to vector<128x128xf32>
    %59 = vector.broadcast %35 : vector<1x128xf32> to vector<128x128xf32>
    %60 = arith.mulf %58, %59 : vector<128x128xf32>
    %61 = vector.broadcast %45 : vector<128x1xf32> to vector<128x128xf32>
    %62 = arith.mulf %61, %60 : vector<128x128xf32>
    %63 = vector.broadcast %36 : vector<1x128xf32> to vector<128x128xf32>
    %64 = arith.subf %63, %62 : vector<128x128xf32>
    %65 = arith.mulf %41, %60 : vector<128x128xf32>
    %66 = arith.addf %65, %64 : vector<128x128xf32>
    %c0_28 = arith.constant 0 : index
    %c0_29 = arith.constant 0 : index
    %67 = vector.load %arg6[%c0_28, %c0_29] : memref<128x128xf32, #tpu.memory_space<vmem>>, vector<128x128xf32>
    tpu.vector_store %arg6[%c0_28, %c0_29], %66 {strides = array<i32>} : memref<128x128xf32, #tpu.memory_space<vmem>>, vector<128x128xf32>,
    return
  }
  func.func @transform_0(%arg0: i32) -> (i32, i32) {
    %c0_i32 = arith.constant 0 : i32
    %c0_i32_0 = arith.constant 0 : i32
    return %arg0, %c0_i32 : i32, i32
  }
  func.func @transform_1(%arg0: i32) -> (i32, i32) {
    %c0_i32 = arith.constant 0 : i32
    %c0_i32_0 = arith.constant 0 : i32
    %c0_i32_1 = arith.constant 0 : i32
    return %c0_i32, %c0_i32_0 : i32, i32
  }
  func.func @transform_2(%arg0: i32) -> (i32, i32) {
    %c0_i32 = arith.constant 0 : i32
    %c0_i32_0 = arith.constant 0 : i32
    %c0_i32_1 = arith.constant 0 : i32
    return %c0_i32, %c0_i32_0 : i32, i32
  }
  func.func @transform_3(%arg0: i32) -> (i32, i32) {
    %c0_i32 = arith.constant 0 : i32
    %c0_i32_0 = arith.constant 0 : i32
    %c0_i32_1 = arith.constant 0 : i32
    return %c0_i32, %c0_i32_0 : i32, i32
  }
  func.func @transform_4(%arg0: i32) -> (i32, i32) {
    %c0_i32 = arith.constant 0 : i32
    %c0_i32_0 = arith.constant 0 : i32
    %c0_i32_1 = arith.constant 0 : i32
    return %c0_i32, %c0_i32_0 : i32, i32
  }
  func.func @transform_5(%arg0: i32) -> (i32, i32) {
    %c0_i32 = arith.constant 0 : i32
    %c0_i32_0 = arith.constant 0 : i32
    return %arg0, %c0_i32 : i32, i32
  }
}

</mosaic_0001>

<llo_original>
// kernel: tpu_custom_call.1
$region0: #{tpu_custom_call.1}
  #allocation0 [shape = 'u32[]', space=smem, size = 0x4, offset = 0x4, fixed_abs, tag = 'smem constant byte address 0x4 - core index']
  #allocation1 [shape = 'u32[144,128]{1,0:T(1,128)}', space=vmem, size = 0x12000, scoped, tag = 'internal scratch']
  %s0 = inlined_call_operand.hbm [shape: f32[256,128], index: 0, kind: input, shape index: {}]
  %s1 = inlined_call_operand.hbm [shape: bf16[128,256], index: 1, kind: input, shape index: {}]
  %s2 = inlined_call_operand.hbm [shape: f32[3,256], index: 2, kind: input, shape index: {}]
  %s3 = inlined_call_operand.hbm [shape: bf16[256,128], index: 3, kind: input, shape index: {}]
  %s4 = inlined_call_operand.vmem [shape: f32[3,128], index: 4, kind: input, shape index: {}]
  %s5 = inlined_call_operand.hbm [shape: f32[256,128], index: 5, kind: output, shape index: {}]
  %s6 = sld [smem:[#allocation0]]
  $region69: #{tpu_custom_call.1} parent=0
    _
  %s8 = ssub.s32 1, %s6
  %s9 = scalar_select 0, %s8, %s6
  $region1: #{tpu_custom_call.1} parent=0
    #allocation2 [shape = 'u8[131072]{0}', space=vmem, size = 0x20000, scoped, tag = 'input window, operand 0']
    #allocation3 [shape = 's32[2]{0}', space=sflag, size = 0x8, scoped, tag = 'scoped memory for tpu_custom_call.1']
    #allocation4 [shape = 's32[2]{0}', space=sflag, size = 0x8, scoped, tag = 'scoped memory for tpu_custom_call.1']
    #allocation5 [shape = 'u8[65536]{0}', space=vmem, size = 0x10000, scoped, tag = 'input window, operand 1, single buffered']
    #allocation6 [shape = 's32[1]{0}', space=sflag, size = 0x4, scoped, tag = 'scoped memory for tpu_custom_call.1']
    #allocation7 [shape = 'u8[4096]{0}', space=vmem, size = 0x1000, scoped, tag = 'input window, operand 2, single buffered']
    #allocation8 [shape = 'u8[65536]{0}', space=vmem, size = 0x10000, scoped, tag = 'input window, operand 3, single buffered']
    #allocation9 [shape = 's32[1]{0}', space=sflag, size = 0x4, scoped, tag = 'scoped memory for tpu_custom_call.1']
    #allocation10 [shape = 'u8[131072]{0}', space=vmem, size = 0x20000, scoped, tag = 'output window, operand 0']
    %10 = vsyncpa [#allocation3], 0
    %s11 = scalar_lea.sflag [#allocation3], 1
    %12 = vsyncpa %s11, 0
    %13 = vsyncpa [#allocation6], 0
    %14 = vsyncpa [#allocation9], 0
    %15 = vsyncpa [#allocation4], 0
    %s16 = scalar_lea.sflag [#allocation4], 1
    %17 = vsyncpa %s16, 0
    loop: start=0, step=1, limit=4
    $region2: #{tpu_custom_call.1} parent=1 // loop_pre_header
      _
    $region3: #{tpu_custom_call.1} parent=1 // loop_header
      %s19 = sphi 0, %s23
      %p20 = scmp.ge.s32.totalorder %s19, 4
      %s29 = sphi 0, %s31
      %s32 = sphi 0, %s29
      %s33 = sphi 0, %s32
      %s49 = sphi 0, %s33
      %s53 = sphi 0, %s53
      %s55 = sphi 0, %s53
      %s56 = sphi 0, %s55
      %s70 = sphi 0, %s56
      %s74 = sphi 0, %s74
      %s76 = sphi 0, %s74
      %s77 = sphi 0, %s76
      %s91 = sphi 0, %s77
      %s95 = sphi 0, %s95
      %s97 = sphi 0, %s95
      %s98 = sphi 0, %s97
      %s112 = sphi 0, %s98
      %s116 = sphi 0, %s116
      %s118 = sphi 0, %s116
      %s119 = sphi 0, %s118
      %s133 = sphi 0, %s119
      %s139 = sphi 0, %s141
      %s142 = sphi 0, %s139
      %s143 = sphi 0, %s142
      %s159 = sphi 0, %s143
    $region4: #{tpu_custom_call.1} parent=1 // loop_header_branch
      %22 = sbr.rel (%p20) target = $region8
    $region5: #{tpu_custom_call.1} parent=1 // loop_body
      %s24 = ssub.s32 %s19, 1
      %s25 = ssub.s32 %s19, 2
      %s26 = sadd.s32 %s19, 1
      %s27 = ssub.s32 %s19, %s26
      %p28 = scmp.eq.s32.totalorder %s27, 0
      %s30 = sadd.s32 %s29, 1
      %s31 = scalar_select %p28, %s29, %s30
      %p34 = pneg %p28
      %p35 = scmp.eq.s32.totalorder %s19, 1
      %p36 = por %p34, %p35
      %p37 = scmp.ne.s32.totalorder %s29, %s32
      %p38 = scmp.eq.s32.totalorder %s19, 0
      %p39 = por %p37, %p38
      %p40 = scmp.ne.s32.totalorder %s29, %s32
      %p41 = scmp.eq.s32.totalorder %s24, 1
      %p42 = por %p40, %p41
      %p43 = scmp.ne.s32.totalorder %s32, %s33
      %p44 = scmp.eq.s32.totalorder %s24, 0
      %p45 = por %p43, %p44
      %p46 = scmp.ne.s32.totalorder %s32, %s33
      %p47 = scmp.eq.s32.totalorder %s25, 1
      %p48 = por %p46, %p47
      %p50 = scmp.ne.s32.totalorder %s33, %s49
      %p51 = scmp.eq.s32.totalorder %s25, 0
      %p52 = por %p50, %p51
      %s54 = sadd.s32 %s53, 1
      %p57 = scmp.eq.s32.totalorder %s19, 1
      %p58 = scmp.ne.s32.totalorder %s53, %s55
      %p59 = scmp.eq.s32.totalorder %s19, 0
      %p60 = por %p58, %p59
      %p61 = scmp.ne.s32.totalorder %s53, %s55
      %p62 = scmp.eq.s32.totalorder %s24, 1
      %p63 = por %p61, %p62
      %p64 = scmp.ne.s32.totalorder %s55, %s56
      %p65 = scmp.eq.s32.totalorder %s24, 0
      %p66 = por %p64, %p65
      %p67 = scmp.ne.s32.totalorder %s55, %s56
      %p68 = scmp.eq.s32.totalorder %s25, 1
      %p69 = por %p67, %p68
      %p71 = scmp.ne.s32.totalorder %s56, %s70
      %p72 = scmp.eq.s32.totalorder %s25, 0
      %p73 = por %p71, %p72
      %s75 = sadd.s32 %s74, 1
      %p78 = scmp.eq.s32.totalorder %s19, 1
      %p79 = scmp.ne.s32.totalorder %s74, %s76
      %p80 = scmp.eq.s32.totalorder %s19, 0
      %p81 = por %p79, %p80
      %p82 = scmp.ne.s32.totalorder %s74, %s76
      %p83 = scmp.eq.s32.totalorder %s24, 1
      %p84 = por %p82, %p83
      %p85 = scmp.ne.s32.totalorder %s76, %s77
      %p86 = scmp.eq.s32.totalorder %s24, 0
      %p87 = por %p85, %p86
      %p88 = scmp.ne.s32.totalorder %s76, %s77
      %p89 = scmp.eq.s32.totalorder %s25, 1
      %p90 = por %p88, %p89
      %p92 = scmp.ne.s32.totalorder %s77, %s91
      %p93 = scmp.eq.s32.totalorder %s25, 0
      %p94 = por %p92, %p93
      %s96 = sadd.s32 %s95, 1
      %p99 = scmp.eq.s32.totalorder %s19, 1
      %p100 = scmp.ne.s32.totalorder %s95, %s97
      %p101 = scmp.eq.s32.totalorder %s19, 0
      %p102 = por %p100, %p101
      %p103 = scmp.ne.s32.totalorder %s95, %s97
      %p104 = scmp.eq.s32.totalorder %s24, 1
      %p105 = por %p103, %p104
      %p106 = scmp.ne.s32.totalorder %s97, %s98
      %p107 = scmp.eq.s32.totalorder %s24, 0
      %p108 = por %p106, %p107
      %p109 = scmp.ne.s32.totalorder %s97, %s98
      %p110 = scmp.eq.s32.totalorder %s25, 1
      %p111 = por %p109, %p110
      %p113 = scmp.ne.s32.totalorder %s98, %s112
      %p114 = scmp.eq.s32.totalorder %s25, 0
      %p115 = por %p113, %p114
      %s117 = sadd.s32 %s116, 1
      %p120 = scmp.eq.s32.totalorder %s19, 1
      %p121 = scmp.ne.s32.totalorder %s116, %s118
      %p122 = scmp.eq.s32.totalorder %s19, 0
      %p123 = por %p121, %p122
      %p124 = scmp.ne.s32.totalorder %s116, %s118
      %p125 = scmp.eq.s32.totalorder %s24, 1
      %p126 = por %p124, %p125
      %p127 = scmp.ne.s32.totalorder %s118, %s119
      %p128 = scmp.eq.s32.totalorder %s24, 0
      %p129 = por %p127, %p128
      %p130 = scmp.ne.s32.totalorder %s118, %s119
      %p131 = scmp.eq.s32.totalorder %s25, 1
      %p132 = por %p130, %p131
      %p134 = scmp.ne.s32.totalorder %s119, %s133
      %p135 = scmp.eq.s32.totalorder %s25, 0
      %p136 = por %p134, %p135
      %s137 = ssub.s32 %s19, %s26
      %p138 = scmp.eq.s32.totalorder %s137, 0
      %s140 = sadd.s32 %s139, 1
      %s141 = scalar_select %p138, %s139, %s140
      %p144 = pneg %p138
      %p145 = scmp.eq.s32.totalorder %s19, 1
      %p146 = por %p144, %p145
      %p147 = scmp.ne.s32.totalorder %s139, %s142
      %p148 = scmp.eq.s32.totalorder %s19, 0
      %p149 = por %p147, %p148
      %p150 = scmp.ne.s32.totalorder %s139, %s142
      %p151 = scmp.eq.s32.totalorder %s24, 1
      %p152 = por %p150, %p151
      %p153 = scmp.ne.s32.totalorder %s142, %s143
      %p154 = scmp.eq.s32.totalorder %s24, 0
      %p155 = por %p153, %p154
      %p156 = scmp.ne.s32.totalorder %s142, %s143
      %p157 = scmp.eq.s32.totalorder %s25, 1
      %p158 = por %p156, %p157
      %p160 = scmp.ne.s32.totalorder %s143, %s159
      %p161 = scmp.eq.s32.totalorder %s25, 0
      %p162 = por %p160, %p161
      %p163 = scmp.le.s32.totalorder 1, %s19
      %p164 = scmp.lt.s32.totalorder %s19, 3
      %p165 = pnand %p163, %p164
      %p166 = pneg %p165
      // Predicated region
      $region9: #{tpu_custom_call.1} parent=5 // pred_check
        _
      $region10: #{tpu_custom_call.1} parent=5 // pred_check_branch
        %168 = sbr.rel (%p165) target = $region12
      $region11: #{tpu_custom_call.1} parent=5 // pred_region
        %s169 = ssub.s32 %s19, 1
        // Predicated region
        $region13: #{tpu_custom_call.1} parent=11 // pred_check
          %p170 = pneg %p66
        $region14: #{tpu_custom_call.1} parent=11 // pred_check_branch
          %172 = sbr.rel (%p170) target = $region16
        $region15: #{tpu_custom_call.1} parent=11 // pred_region
          %s174 = ssub.s32 2048, 2048
          %175 = vsyncadd [#allocation6], %s174
          %s176 = sshll.u32 [#allocation5], 4
          %s177 = int_to_ptr.vmem [resolvable:$true] %s176
          %182 = dma.hbm_to_vmem [thread:$0]  %s1, 2048, %s177, [#allocation6], 128, 128, 8
        $region16: #{tpu_custom_call.1} parent=11 // pred_fallthru
          _
        // Predicated region
        $region17: #{tpu_custom_call.1} parent=11 // pred_check
          %p183 = pneg %p87
        $region18: #{tpu_custom_call.1} parent=11 // pred_check_branch
          %185 = sbr.rel (%p183) target = $region20
        $region19: #{tpu_custom_call.1} parent=11 // pred_region
          %s187 = ssub.s32 128, 128
          %188 = vsyncadd [#allocation6], %s187
          %s190 = sshll.u32 [#allocation7], 4
          %s191 = int_to_ptr.vmem [resolvable:$true] %s190
          %193 = dma.hbm_to_vmem [thread:$0]  %s2, 128, %s191, [#allocation6]
        $region20: #{tpu_custom_call.1} parent=11 // pred_fallthru
          _
        // Predicated region
        $region21: #{tpu_custom_call.1} parent=11 // pred_check
          %p194 = pneg %p108
        $region22: #{tpu_custom_call.1} parent=11 // pred_check_branch
          %196 = sbr.rel (%p194) target = $region24
        $region23: #{tpu_custom_call.1} parent=11 // pred_region
          %s198 = ssub.s32 2048, 2048
          %199 = vsyncadd [#allocation9], %s198
          %s200 = sshll.u32 [#allocation8], 4
          %s201 = int_to_ptr.vmem [resolvable:$true] %s200
          %206 = dma.hbm_to_vmem [thread:$0]  %s3, 2048, %s201, [#allocation9], 64, 64, 4
        $region24: #{tpu_custom_call.1} parent=11 // pred_fallthru
          _
        // Predicated region
        $region25: #{tpu_custom_call.1} parent=11 // pred_check
          %p207 = pneg %p129
        $region26: #{tpu_custom_call.1} parent=11 // pred_check_branch
          %209 = sbr.rel (%p207) target = $region28
        $region27: #{tpu_custom_call.1} parent=11 // pred_region
          _
        $region28: #{tpu_custom_call.1} parent=11 // pred_fallthru
          _
      $region12: #{tpu_custom_call.1} parent=5 // pred_fallthru
        _
      %p210 = scmp.lt.s32.totalorder %s19, 2
      // Predicated region
      $region29: #{tpu_custom_call.1} parent=5 // pred_check
        %p211 = pneg %p210
      $region30: #{tpu_custom_call.1} parent=5 // pred_check_branch
        %213 = sbr.rel (%p211) target = $region32
      $region31: #{tpu_custom_call.1} parent=5 // pred_region
        // Predicated region
        $region33: #{tpu_custom_call.1} parent=31 // pred_check
          %p214 = pneg %p39
        $region34: #{tpu_custom_call.1} parent=31 // pred_check_branch
          %216 = sbr.rel (%p214) target = $region36
        $region35: #{tpu_custom_call.1} parent=31 // pred_region
          %s217 = sand.u32 %s29, 1
          %s218 = scalar_lea.sflag [#allocation3], %s217
          %s219 = sand.u32 %s29, 1
          %s220 = smul.addr %s219, 128
          %s221 = scalar_lea.vmem [#allocation2], %s220
          %s222 = smul.u32 16, %s19
          %s224 = ssub.s32 2048, 2048
          %225 = vsyncadd %s218, %s224
          %s226 = smul.addr %s222, 128
          %s227 = scalar_lea.hbm %s0, %s226
          %s228 = sshll.u32 %s221, 4
          %s229 = int_to_ptr.vmem [resolvable:$true] %s228
          %234 = dma.hbm_to_vmem [thread:$0]  %s227, 2048, %s229, %s218, 128, 128, 8
        $region36: #{tpu_custom_call.1} parent=31 // pred_fallthru
          _
      $region32: #{tpu_custom_call.1} parent=5 // pred_fallthru
        _
      %p235 = scmp.le.s32.totalorder 1, %s19
      %p236 = scmp.lt.s32.totalorder %s19, 3
      %p237 = pnand %p235, %p236
      %p238 = pneg %p237
      // Predicated region
      $region37: #{tpu_custom_call.1} parent=5 // pred_check
        _
      $region38: #{tpu_custom_call.1} parent=5 // pred_check_branch
        %240 = sbr.rel (%p237) target = $region40
      $region39: #{tpu_custom_call.1} parent=5 // pred_region
        %s241 = ssub.s32 %s19, 1
        %s242 = sand.u32 %s32, 1
        %s243 = scalar_lea.sflag [#allocation3], %s242
        %s244 = sand.u32 %s32, 1
        %s245 = smul.addr %s244, 128
        %s246 = scalar_lea.vmem [#allocation2], %s245
        // Predicated region
        $region41: #{tpu_custom_call.1} parent=39 // pred_check
          %p247 = pneg %p45
        $region42: #{tpu_custom_call.1} parent=39 // pred_check_branch
          %249 = sbr.rel (%p247) target = $region44
        $region43: #{tpu_custom_call.1} parent=39 // pred_region
          %250 = dma.done %s243, 2048
        $region44: #{tpu_custom_call.1} parent=39 // pred_fallthru
          _
        // Predicated region
        $region45: #{tpu_custom_call.1} parent=39 // pred_check
          %p251 = pneg %p66
        $region46: #{tpu_custom_call.1} parent=39 // pred_check_branch
          %253 = sbr.rel (%p251) target = $region48
        $region47: #{tpu_custom_call.1} parent=39 // pred_region
          %254 = dma.done [#allocation6], 2048
        $region48: #{tpu_custom_call.1} parent=39 // pred_fallthru
          _
        // Predicated region
        $region49: #{tpu_custom_call.1} parent=39 // pred_check
          %p255 = pneg %p87
        $region50: #{tpu_custom_call.1} parent=39 // pred_check_branch
          %257 = sbr.rel (%p255) target = $region52
        $region51: #{tpu_custom_call.1} parent=39 // pred_region
          %258 = dma.done [#allocation6], 128
        $region52: #{tpu_custom_call.1} parent=39 // pred_fallthru
          _
        // Predicated region
        $region53: #{tpu_custom_call.1} parent=39 // pred_check
          %p259 = pneg %p108
        $region54: #{tpu_custom_call.1} parent=39 // pred_check_branch
          %261 = sbr.rel (%p259) target = $region56
        $region55: #{tpu_custom_call.1} parent=39 // pred_region
          %262 = dma.done [#allocation9], 2048
        $region56: #{tpu_custom_call.1} parent=39 // pred_fallthru
          _
        %s263 = sand.u32 %s32, 1
        %s264 = scalar_lea.sflag [#allocation3], %s263
        %s265 = sand.u32 %s32, 1
        %s266 = smul.addr %s265, 128
        %s267 = scalar_lea.vmem [#allocation2], %s266
        %p268 = pneg %p45
        %p269 = pneg %p42
        %p270 = pneg %p66
        %p271 = pneg %p63
        %p272 = pneg %p87
        %p273 = pneg %p84
        %p274 = pneg %p108
        %p275 = pneg %p105
        %p276 = pneg %p129
        %p277 = pneg %p126
        %p278 = pneg %p155
        %p279 = pneg %p152
        %s280 = sand.u32 %s142, 1
        %s281 = scalar_lea.sflag [#allocation4], %s280
        %s282 = sand.u32 %s142, 1
        %s283 = smul.addr %s282, 128
        %s284 = scalar_lea.vmem [#allocation10], %s283
        %s285 = smul.u32 16, %s24
        %s286 = smul.u32 16, %s24
        %v288 = vld [vmem:[%s246] sm:$0xff]
        %v289 = vld [vmem:[%s246 + $0x8] sm:$0xff]
        %v290 = vld [vmem:[%s246 + $0x10] sm:$0xff]
        %v291 = vld [vmem:[%s246 + $0x18] sm:$0xff]
        %v292 = vld [vmem:[%s246 + $0x20] sm:$0xff]
        %v293 = vld [vmem:[%s246 + $0x28] sm:$0xff]
        %v294 = vld [vmem:[%s246 + $0x30] sm:$0xff]
        %v295 = vld [vmem:[%s246 + $0x38] sm:$0xff]
        %v296 = vld [vmem:[%s246 + $0x40] sm:$0xff]
        %v297 = vld [vmem:[%s246 + $0x48] sm:$0xff]
        %v298 = vld [vmem:[%s246 + $0x50] sm:$0xff]
        %v299 = vld [vmem:[%s246 + $0x58] sm:$0xff]
        %v300 = vld [vmem:[%s246 + $0x60] sm:$0xff]
        %v301 = vld [vmem:[%s246 + $0x68] sm:$0xff]
        %v302 = vld [vmem:[%s246 + $0x70] sm:$0xff]
        %v303 = vld [vmem:[%s246 + $0x78] sm:$0xff]
        %v304 = vpack.c.bf16 %v289, %v288
        %v305 = vpack.c.bf16 %v291, %v290
        %v306 = vpack.c.bf16 %v293, %v292
        %v307 = vpack.c.bf16 %v295, %v294
        %v308 = vpack.c.bf16 %v297, %v296
        %v309 = vpack.c.bf16 %v299, %v298
        %v310 = vpack.c.bf16 %v301, %v300
        %v311 = vpack.c.bf16 %v303, %v302
        %v312 = vld [vmem:[#allocation7] ss:$4 sm:$0x3]
        %s313 = scalar_lea.vmem [#allocation7], 1
        %v314 = vld [vmem:[%s313] ss:$4 sm:$0x3]
        %s315 = scalar_lea.vmem [#allocation7], 2
        %v316 = vld [vmem:[%s315] ss:$4 sm:$0x3]
        %v317 = vld [vmem:[#allocation5] sm:$0xff]
        %v318 = vld [vmem:[#allocation5 + $0x8] sm:$0xff]
        %v319 = vld [vmem:[#allocation5 + $0x10] sm:$0xff]
        %v320 = vld [vmem:[#allocation5 + $0x18] sm:$0xff]
        %v321 = vld [vmem:[#allocation5 + $0x20] sm:$0xff]
        %v322 = vld [vmem:[#allocation5 + $0x28] sm:$0xff]
        %v323 = vld [vmem:[#allocation5 + $0x30] sm:$0xff]
        %v324 = vld [vmem:[#allocation5 + $0x38] sm:$0xff]
        %v325 = vld [vmem:[#allocation5 + $0x40] sm:$0xff]
        %v326 = vld [vmem:[#allocation5 + $0x48] sm:$0xff]
        %v327 = vld [vmem:[#allocation5 + $0x50] sm:$0xff]
        %v328 = vld [vmem:[#allocation5 + $0x58] sm:$0xff]
        %v329 = vld [vmem:[#allocation5 + $0x60] sm:$0xff]
        %v330 = vld [vmem:[#allocation5 + $0x68] sm:$0xff]
        %v331 = vld [vmem:[#allocation5 + $0x70] sm:$0xff]
        %v332 = vld [vmem:[#allocation5 + $0x78] sm:$0xff]
        %v334 = vlaneseq
        %v335 = vshrl.u32 %v334, 7
        %v336 = vsub.s32 0, %v335
        %v337 = vrot.slane %v312, %v336
        %v338 = vlaneseq
        %v339 = vshrl.u32 %v338, 7
        %v340 = vsub.s32 1, %v339
        %v341 = vrot.slane %v312, %v340
        %v360 = vunpack.c.l.b16 %v317
        %v361 = vunpack.c.h.b16 %v317
        %v362 = vunpack.c.l.b16 %v318
        %v363 = vunpack.c.h.b16 %v318
        %v364 = vunpack.c.l.b16 %v319
        %v365 = vunpack.c.h.b16 %v319
        %v366 = vunpack.c.l.b16 %v320
        %v367 = vunpack.c.h.b16 %v320
        %v368 = vunpack.c.l.b16 %v321
        %v369 = vunpack.c.h.b16 %v321
        %v370 = vunpack.c.l.b16 %v322
        %v371 = vunpack.c.h.b16 %v322
        %v372 = vunpack.c.l.b16 %v323
        %v373 = vunpack.c.h.b16 %v323
        %v374 = vunpack.c.l.b16 %v324
        %v375 = vunpack.c.h.b16 %v324
        %v376 = vunpack.c.l.b16 %v325
        %v377 = vunpack.c.h.b16 %v325
        %v378 = vunpack.c.l.b16 %v326
        %v379 = vunpack.c.h.b16 %v326
        %v380 = vunpack.c.l.b16 %v327
        %v381 = vunpack.c.h.b16 %v327
        %v382 = vunpack.c.l.b16 %v328
        %v383 = vunpack.c.h.b16 %v328
        %v384 = vunpack.c.l.b16 %v329
        %v385 = vunpack.c.h.b16 %v329
        %v386 = vunpack.c.l.b16 %v330
        %v387 = vunpack.c.h.b16 %v330
        %v388 = vunpack.c.l.b16 %v331
        %v389 = vunpack.c.h.b16 %v331
        %v390 = vunpack.c.l.b16 %v332
        %v391 = vunpack.c.h.b16 %v332
        %v392 = vpack.c.b16 %v362, %v360
        %v393 = vpack.c.b16 %v363, %v361
        %v394 = vpack.c.b16 %v366, %v364
        %v395 = vpack.c.b16 %v367, %v365
        %v396 = vpack.c.b16 %v370, %v368
        %v397 = vpack.c.b16 %v371, %v369
        %v398 = vpack.c.b16 %v374, %v372
        %v399 = vpack.c.b16 %v375, %v373
        %v400 = vpack.c.b16 %v378, %v376
        %v401 = vpack.c.b16 %v379, %v377
        %v402 = vpack.c.b16 %v382, %v380
        %v403 = vpack.c.b16 %v383, %v381
        %v404 = vpack.c.b16 %v386, %v384
        %v405 = vpack.c.b16 %v387, %v385
        %v406 = vpack.c.b16 %v390, %v388
        %v407 = vpack.c.b16 %v391, %v389
        %424 = vmatprep.subr.bf16.mxu0 %v407
        %425 = vmatpush1.bf16.msra.mxu0 %v406
        %426 = vmatprep.subr.bf16.mxu0 %v405
        %427 = vmatpush1.bf16.msra.mxu0 %v404
        %428 = vmatprep.subr.bf16.mxu0 %v403
        %429 = vmatpush1.bf16.msra.mxu0 %v402
        %430 = vmatprep.subr.bf16.mxu0 %v401
        %431 = vmatpush1.bf16.msra.mxu0 %v400
        %432 = vmatprep.subr.bf16.mxu0 %v399
        %433 = vmatpush1.bf16.msra.mxu0 %v398
        %434 = vmatprep.subr.bf16.mxu0 %v397
        %435 = vmatpush1.bf16.msra.mxu0 %v396
        %436 = vmatprep.subr.bf16.mxu0 %v395
        %437 = vmatpush1.bf16.msra.mxu0 %v394
        %438 = vmatprep.subr.bf16.mxu0 %v393
        %439 = vmatpush1.bf16.msra.mxu0 %v392
        %440 = vmatprep.subr.bf16.mxu0 0
        %441 = vmatpush2.bf16.msra.mxu0 0
        %442 = vmatprep.subr.bf16.mxu0 0
        %443 = vmatpush2.bf16.msra.mxu0 0
        %444 = vmatprep.subr.bf16.mxu0 0
        %445 = vmatpush2.bf16.msra.mxu0 0
        %446 = vmatprep.subr.bf16.mxu0 0
        %447 = vmatpush2.bf16.msra.mxu0 0
        %448 = vmatprep.subr.bf16.mxu0 0
        %449 = vmatpush2.bf16.msra.mxu0 0
        %450 = vmatprep.subr.bf16.mxu0 0
        %451 = vmatpush2.bf16.msra.mxu0 0
        %452 = vmatprep.subr.bf16.mxu0 0
        %453 = vmatpush2.bf16.msra.mxu0 0
        %454 = vmatprep.subr.bf16.mxu0 0
        %455 = vmatpush2.bf16.msra.mxu0 0
        %456 = vmatprep.mubr.bf16.mxu0 0
        %457 = vmatmul.mubr.bf16.gmra.mxu0 %v304
        %v458 = vpop.f32.mrf.mxu0
        %v459 = vadd.f32 %v337, %v458
        %v460 = vpop.f32.mrf.mxu0
        %v461 = vadd.f32 %v341, %v460
        %v462 = vpop.f32.mrf.mxu0
        %v463 = vadd.f32 %v337, %v462
        %v464 = vpop.f32.mrf.mxu0
        %v465 = vadd.f32 %v341, %v464
        %466 = vmatprep.mubr.bf16.mxu0 0
        %467 = vmatmul.mubr.bf16.gmra.mxu0 %v305
        %v468 = vpop.f32.mrf.mxu0
        %v469 = vadd.f32 %v337, %v468
        %v470 = vpop.f32.mrf.mxu0
        %v471 = vadd.f32 %v341, %v470
        %v472 = vpop.f32.mrf.mxu0
        %v473 = vadd.f32 %v337, %v472
        %v474 = vpop.f32.mrf.mxu0
        %v475 = vadd.f32 %v341, %v474
        %476 = vmatprep.mubr.bf16.mxu0 0
        %477 = vmatmul.mubr.bf16.gmra.mxu0 %v306
        %v478 = vpop.f32.mrf.mxu0
        %v479 = vadd.f32 %v337, %v478
        %v480 = vpop.f32.mrf.mxu0
        %v481 = vadd.f32 %v341, %v480
        %v482 = vpop.f32.mrf.mxu0
        %v483 = vadd.f32 %v337, %v482
        %v484 = vpop.f32.mrf.mxu0
        %v485 = vadd.f32 %v341, %v484
        %486 = vmatprep.mubr.bf16.mxu0 0
        %487 = vmatmul.mubr.bf16.gmra.mxu0 %v307
        %v488 = vpop.f32.mrf.mxu0
        %v489 = vadd.f32 %v337, %v488
        %v490 = vpop.f32.mrf.mxu0
        %v491 = vadd.f32 %v341, %v490
        %v492 = vpop.f32.mrf.mxu0
        %v493 = vadd.f32 %v337, %v492
        %v494 = vpop.f32.mrf.mxu0
        %v495 = vadd.f32 %v341, %v494
        %496 = vmatprep.mubr.bf16.mxu0 0
        %497 = vmatmul.mubr.bf16.gmra.mxu0 %v308
        %v498 = vpop.f32.mrf.mxu0
        %v499 = vadd.f32 %v337, %v498
        %v500 = vpop.f32.mrf.mxu0
        %v501 = vadd.f32 %v341, %v500
        %v502 = vpop.f32.mrf.mxu0
        %v503 = vadd.f32 %v337, %v502
        %v504 = vpop.f32.mrf.mxu0
        %v505 = vadd.f32 %v341, %v504
        %506 = vmatprep.mubr.bf16.mxu0 0
        %507 = vmatmul.mubr.bf16.gmra.mxu0 %v309
        %v508 = vpop.f32.mrf.mxu0
        %v509 = vadd.f32 %v337, %v508
        %v510 = vpop.f32.mrf.mxu0
        %v511 = vadd.f32 %v341, %v510
        %v512 = vpop.f32.mrf.mxu0
        %v513 = vadd.f32 %v337, %v512
        %v514 = vpop.f32.mrf.mxu0
        %v515 = vadd.f32 %v341, %v514
        %516 = vmatprep.mubr.bf16.mxu0 0
        %517 = vmatmul.mubr.bf16.gmra.mxu0 %v310
        %v518 = vpop.f32.mrf.mxu0
        %v519 = vadd.f32 %v337, %v518
        %v520 = vpop.f32.mrf.mxu0
        %v521 = vadd.f32 %v341, %v520
        %v522 = vpop.f32.mrf.mxu0
        %v523 = vadd.f32 %v337, %v522
        %v524 = vpop.f32.mrf.mxu0
        %v525 = vadd.f32 %v341, %v524
        %526 = vmatprep.mubr.bf16.mxu0 0
        %527 = vmatmul.mubr.bf16.gmra.mxu0 %v311
        %v528 = vpop.f32.mrf.mxu0
        %v529 = vadd.f32 %v337, %v528
        %v530 = vpop.f32.mrf.mxu0
        %v531 = vadd.f32 %v341, %v530
        %v532 = vpop.f32.mrf.mxu0
        %v533 = vadd.f32 %v337, %v532
        %v534 = vpop.f32.mrf.mxu0
        %v535 = vadd.f32 %v341, %v534
        %536 = vdwg.mxu0
        %v537 = vadd.f32 %v459, %v461
        %538 = vadd.xlane.f32.xlu0 %v537
        %v539 = vpop.xlane.xlu0 %538
        %v540 = vadd.f32 %v463, %v465
        %541 = vadd.xlane.f32.xlu0 %v540
        %v542 = vpop.xlane.xlu0 %541
        %v543 = vadd.f32 %v469, %v471
        %544 = vadd.xlane.f32.xlu0 %v543
        %v545 = vpop.xlane.xlu0 %544
        %v546 = vadd.f32 %v473, %v475
        %547 = vadd.xlane.f32.xlu0 %v546
        %v548 = vpop.xlane.xlu0 %547
        %v549 = vadd.f32 %v479, %v481
        %550 = vadd.xlane.f32.xlu0 %v549
        %v551 = vpop.xlane.xlu0 %550
        %v552 = vadd.f32 %v483, %v485
        %553 = vadd.xlane.f32.xlu0 %v552
        %v554 = vpop.xlane.xlu0 %553
        %v555 = vadd.f32 %v489, %v491
        %556 = vadd.xlane.f32.xlu0 %v555
        %v557 = vpop.xlane.xlu0 %556
        %v558 = vadd.f32 %v493, %v495
        %559 = vadd.xlane.f32.xlu0 %v558
        %v560 = vpop.xlane.xlu0 %559
        %v561 = vadd.f32 %v499, %v501
        %562 = vadd.xlane.f32.xlu0 %v561
        %v563 = vpop.xlane.xlu0 %562
        %v564 = vadd.f32 %v503, %v505
        %565 = vadd.xlane.f32.xlu0 %v564
        %v566 = vpop.xlane.xlu0 %565
        %v567 = vadd.f32 %v509, %v511
        %568 = vadd.xlane.f32.xlu0 %v567
        %v569 = vpop.xlane.xlu0 %568
        %v570 = vadd.f32 %v513, %v515
        %571 = vadd.xlane.f32.xlu0 %v570
        %v572 = vpop.xlane.xlu0 %571
        %v573 = vadd.f32 %v519, %v521
        %574 = vadd.xlane.f32.xlu0 %v573
        %v575 = vpop.xlane.xlu0 %574
        %v576 = vadd.f32 %v523, %v525
        %577 = vadd.xlane.f32.xlu0 %v576
        %v578 = vpop.xlane.xlu0 %577
        %v579 = vadd.f32 %v529, %v531
        %580 = vadd.xlane.f32.xlu0 %v579
        %v581 = vpop.xlane.xlu0 %580
        %v582 = vadd.f32 %v533, %v535
        %583 = vadd.xlane.f32.xlu0 %v582
        %v584 = vpop.xlane.xlu0 %583
        %v585 = vmul.f32 %v539, 0.0052083335
        %v586 = vmul.f32 %v542, 0.0052083335
        %v587 = vmul.f32 %v545, 0.0052083335
        %v588 = vmul.f32 %v548, 0.0052083335
        %v589 = vmul.f32 %v551, 0.0052083335
        %v590 = vmul.f32 %v554, 0.0052083335
        %v591 = vmul.f32 %v557, 0.0052083335
        %v592 = vmul.f32 %v560, 0.0052083335
        %v593 = vmul.f32 %v563, 0.0052083335
        %v594 = vmul.f32 %v566, 0.0052083335
        %v595 = vmul.f32 %v569, 0.0052083335
        %v596 = vmul.f32 %v572, 0.0052083335
        %v597 = vmul.f32 %v575, 0.0052083335
        %v598 = vmul.f32 %v578, 0.0052083335
        %v599 = vmul.f32 %v581, 0.0052083335
        %v600 = vmul.f32 %v584, 0.0052083335
        %v601 = vmul.f32 %v459, %v459
        %v602 = vmul.f32 %v461, %v461
        %v603 = vmul.f32 %v463, %v463
        %v604 = vmul.f32 %v465, %v465
        %v605 = vmul.f32 %v469, %v469
        %v606 = vmul.f32 %v471, %v471
        %v607 = vmul.f32 %v473, %v473
        %v608 = vmul.f32 %v475, %v475
        %v609 = vmul.f32 %v479, %v479
        %v610 = vmul.f32 %v481, %v481
        %v611 = vmul.f32 %v483, %v483
        %v612 = vmul.f32 %v485, %v485
        %v613 = vmul.f32 %v489, %v489
        %v614 = vmul.f32 %v491, %v491
        %v615 = vmul.f32 %v493, %v493
        %v616 = vmul.f32 %v495, %v495
        %v617 = vmul.f32 %v499, %v499
        %v618 = vmul.f32 %v501, %v501
        %v619 = vmul.f32 %v503, %v503
        %v620 = vmul.f32 %v505, %v505
        %v621 = vmul.f32 %v509, %v509
        %v622 = vmul.f32 %v511, %v511
        %v623 = vmul.f32 %v513, %v513
        %v624 = vmul.f32 %v515, %v515
        %v625 = vmul.f32 %v519, %v519
        %v626 = vmul.f32 %v521, %v521
        %v627 = vmul.f32 %v523, %v523
        %v628 = vmul.f32 %v525, %v525
        %v629 = vmul.f32 %v529, %v529
        %v630 = vmul.f32 %v531, %v531
        %v631 = vmul.f32 %v533, %v533
        %v632 = vmul.f32 %v535, %v535
        %v633 = vadd.f32 %v601, %v602
        %634 = vadd.xlane.f32.xlu0 %v633
        %v635 = vpop.xlane.xlu0 %634
        %v636 = vadd.f32 %v603, %v604
        %637 = vadd.xlane.f32.xlu0 %v636
        %v638 = vpop.xlane.xlu0 %637
        %v639 = vadd.f32 %v605, %v606
        %640 = vadd.xlane.f32.xlu0 %v639
        %v641 = vpop.xlane.xlu0 %640
        %v642 = vadd.f32 %v607, %v608
        %643 = vadd.xlane.f32.xlu0 %v642
        %v644 = vpop.xlane.xlu0 %643
        %v645 = vadd.f32 %v609, %v610
        %646 = vadd.xlane.f32.xlu0 %v645
        %v647 = vpop.xlane.xlu0 %646
        %v648 = vadd.f32 %v611, %v612
        %649 = vadd.xlane.f32.xlu0 %v648
        %v650 = vpop.xlane.xlu0 %649
        %v651 = vadd.f32 %v613, %v614
        %652 = vadd.xlane.f32.xlu0 %v651
        %v653 = vpop.xlane.xlu0 %652
        %v654 = vadd.f32 %v615, %v616
        %655 = vadd.xlane.f32.xlu0 %v654
        %v656 = vpop.xlane.xlu0 %655
        %v657 = vadd.f32 %v617, %v618
        %658 = vadd.xlane.f32.xlu0 %v657
        %v659 = vpop.xlane.xlu0 %658
        %v660 = vadd.f32 %v619, %v620
        %661 = vadd.xlane.f32.xlu0 %v660
        %v662 = vpop.xlane.xlu0 %661
        %v663 = vadd.f32 %v621, %v622
        %664 = vadd.xlane.f32.xlu0 %v663
        %v665 = vpop.xlane.xlu0 %664
        %v666 = vadd.f32 %v623, %v624
        %667 = vadd.xlane.f32.xlu0 %v666
        %v668 = vpop.xlane.xlu0 %667
        %v669 = vadd.f32 %v625, %v626
        %670 = vadd.xlane.f32.xlu0 %v669
        %v671 = vpop.xlane.xlu0 %670
        %v672 = vadd.f32 %v627, %v628
        %673 = vadd.xlane.f32.xlu0 %v672
        %v674 = vpop.xlane.xlu0 %673
        %v675 = vadd.f32 %v629, %v630
        %676 = vadd.xlane.f32.xlu0 %v675
        %v677 = vpop.xlane.xlu0 %676
        %v678 = vadd.f32 %v631, %v632
        %679 = vadd.xlane.f32.xlu0 %v678
        %v680 = vpop.xlane.xlu0 %679
        %v681 = vmul.f32 %v635, 0.0052083335
        %v682 = vmul.f32 %v638, 0.0052083335
        %v683 = vmul.f32 %v641, 0.0052083335
        %v684 = vmul.f32 %v644, 0.0052083335
        %v685 = vmul.f32 %v647, 0.0052083335
        %v686 = vmul.f32 %v650, 0.0052083335
        %v687 = vmul.f32 %v653, 0.0052083335
        %v688 = vmul.f32 %v656, 0.0052083335
        %v689 = vmul.f32 %v659, 0.0052083335
        %v690 = vmul.f32 %v662, 0.0052083335
        %v691 = vmul.f32 %v665, 0.0052083335
        %v692 = vmul.f32 %v668, 0.0052083335
        %v693 = vmul.f32 %v671, 0.0052083335
        %v694 = vmul.f32 %v674, 0.0052083335
        %v695 = vmul.f32 %v677, 0.0052083335
        %v696 = vmul.f32 %v680, 0.0052083335
        %v697 = vmul.f32 %v585, %v585
        %v698 = vmul.f32 %v586, %v586
        %v699 = vmul.f32 %v587, %v587
        %v700 = vmul.f32 %v588, %v588
        %v701 = vmul.f32 %v589, %v589
        %v702 = vmul.f32 %v590, %v590
        %v703 = vmul.f32 %v591, %v591
        %v704 = vmul.f32 %v592, %v592
        %v705 = vmul.f32 %v593, %v593
        %v706 = vmul.f32 %v594, %v594
        %v707 = vmul.f32 %v595, %v595
        %v708 = vmul.f32 %v596, %v596
        %v709 = vmul.f32 %v597, %v597
        %v710 = vmul.f32 %v598, %v598
        %v711 = vmul.f32 %v599, %v599
        %v712 = vmul.f32 %v600, %v600
        %v713 = vsub.f32 %v681, %v697
        %v714 = vsub.f32 %v682, %v698
        %v715 = vsub.f32 %v683, %v699
        %v716 = vsub.f32 %v684, %v700
        %v717 = vsub.f32 %v685, %v701
        %v718 = vsub.f32 %v686, %v702
        %v719 = vsub.f32 %v687, %v703
        %v720 = vsub.f32 %v688, %v704
        %v721 = vsub.f32 %v689, %v705
        %v722 = vsub.f32 %v690, %v706
        %v723 = vsub.f32 %v691, %v707
        %v724 = vsub.f32 %v692, %v708
        %v725 = vsub.f32 %v693, %v709
        %v726 = vsub.f32 %v694, %v710
        %v727 = vsub.f32 %v695, %v711
        %v728 = vsub.f32 %v696, %v712
        %v729 = vmax.f32 %v713, 0.0
        %v730 = vmax.f32 %v714, 0.0
        %v731 = vmax.f32 %v715, 0.0
        %v732 = vmax.f32 %v716, 0.0
        %v733 = vmax.f32 %v717, 0.0
        %v734 = vmax.f32 %v718, 0.0
        %v735 = vmax.f32 %v719, 0.0
        %v736 = vmax.f32 %v720, 0.0
        %v737 = vmax.f32 %v721, 0.0
        %v738 = vmax.f32 %v722, 0.0
        %v739 = vmax.f32 %v723, 0.0
        %v740 = vmax.f32 %v724, 0.0
        %v741 = vmax.f32 %v725, 0.0
        %v742 = vmax.f32 %v726, 0.0
        %v743 = vmax.f32 %v727, 0.0
        %v744 = vmax.f32 %v728, 0.0
        %v745 = vadd.f32 %v729, 1e-05
        %v746 = vadd.f32 %v730, 1e-05
        %v747 = vadd.f32 %v731, 1e-05
        %v748 = vadd.f32 %v732, 1e-05
        %v749 = vadd.f32 %v733, 1e-05
        %v750 = vadd.f32 %v734, 1e-05
        %v751 = vadd.f32 %v735, 1e-05
        %v752 = vadd.f32 %v736, 1e-05
        %v753 = vadd.f32 %v737, 1e-05
        %v754 = vadd.f32 %v738, 1e-05
        %v755 = vadd.f32 %v739, 1e-05
        %v756 = vadd.f32 %v740, 1e-05
        %v757 = vadd.f32 %v741, 1e-05
        %v758 = vadd.f32 %v742, 1e-05
        %v759 = vadd.f32 %v743, 1e-05
        %v760 = vadd.f32 %v744, 1e-05
        %v761 = vrsqrt.pop %v745
        %v762 = vrsqrt.pop %v746
        %v763 = vrsqrt.pop %v747
        %v764 = vrsqrt.pop %v748
        %v765 = vrsqrt.pop %v749
        %v766 = vrsqrt.pop %v750
        %v767 = vrsqrt.pop %v751
        %v768 = vrsqrt.pop %v752
        %v769 = vrsqrt.pop %v753
        %v770 = vrsqrt.pop %v754
        %v771 = vrsqrt.pop %v755
        %v772 = vrsqrt.pop %v756
        %v773 = vrsqrt.pop %v757
        %v774 = vrsqrt.pop %v758
        %v775 = vrsqrt.pop %v759
        %v776 = vrsqrt.pop %v760
        %v778 = vlaneseq
        %v779 = vshrl.u32 %v778, 7
        %v780 = vsub.s32 0, %v779
        %v781 = vrot.slane %v314, %v780
        %v782 = vlaneseq
        %v783 = vshrl.u32 %v782, 7
        %v784 = vsub.s32 1, %v783
        %v785 = vrot.slane %v314, %v784
        %v788 = vmul.f32 %v761, %v781
        %v789 = vmul.f32 %v761, %v785
        %v790 = vmul.f32 %v762, %v781
        %v791 = vmul.f32 %v762, %v785
        %v792 = vmul.f32 %v763, %v781
        %v793 = vmul.f32 %v763, %v785
        %v794 = vmul.f32 %v764, %v781
        %v795 = vmul.f32 %v764, %v785
        %v796 = vmul.f32 %v765, %v781
        %v797 = vmul.f32 %v765, %v785
        %v798 = vmul.f32 %v766, %v781
        %v799 = vmul.f32 %v766, %v785
        %v800 = vmul.f32 %v767, %v781
        %v801 = vmul.f32 %v767, %v785
        %v802 = vmul.f32 %v768, %v781
        %v803 = vmul.f32 %v768, %v785
        %v804 = vmul.f32 %v769, %v781
        %v805 = vmul.f32 %v769, %v785
        %v806 = vmul.f32 %v770, %v781
        %v807 = vmul.f32 %v770, %v785
        %v808 = vmul.f32 %v771, %v781
        %v809 = vmul.f32 %v771, %v785
        %v810 = vmul.f32 %v772, %v781
        %v811 = vmul.f32 %v772, %v785
        %v812 = vmul.f32 %v773, %v781
        %v813 = vmul.f32 %v773, %v785
        %v814 = vmul.f32 %v774, %v781
        %v815 = vmul.f32 %v774, %v785
        %v816 = vmul.f32 %v775, %v781
        %v817 = vmul.f32 %v775, %v785
        %v818 = vmul.f32 %v776, %v781
        %v819 = vmul.f32 %v776, %v785
        %v820 = vmul.f32 %v585, %v788
        %v821 = vmul.f32 %v585, %v789
        %v822 = vmul.f32 %v586, %v790
        %v823 = vmul.f32 %v586, %v791
        %v824 = vmul.f32 %v587, %v792
        %v825 = vmul.f32 %v587, %v793
        %v826 = vmul.f32 %v588, %v794
        %v827 = vmul.f32 %v588, %v795
        %v828 = vmul.f32 %v589, %v796
        %v829 = vmul.f32 %v589, %v797
        %v830 = vmul.f32 %v590, %v798
        %v831 = vmul.f32 %v590, %v799
        %v832 = vmul.f32 %v591, %v800
        %v833 = vmul.f32 %v591, %v801
        %v834 = vmul.f32 %v592, %v802
        %v835 = vmul.f32 %v592, %v803
        %v836 = vmul.f32 %v593, %v804
        %v837 = vmul.f32 %v593, %v805
        %v838 = vmul.f32 %v594, %v806
        %v839 = vmul.f32 %v594, %v807
        %v840 = vmul.f32 %v595, %v808
        %v841 = vmul.f32 %v595, %v809
        %v842 = vmul.f32 %v596, %v810
        %v843 = vmul.f32 %v596, %v811
        %v844 = vmul.f32 %v597, %v812
        %v845 = vmul.f32 %v597, %v813
        %v846 = vmul.f32 %v598, %v814
        %v847 = vmul.f32 %v598, %v815
        %v848 = vmul.f32 %v599, %v816
        %v849 = vmul.f32 %v599, %v817
        %v850 = vmul.f32 %v600, %v818
        %v851 = vmul.f32 %v600, %v819
        %v853 = vlaneseq
        %v854 = vshrl.u32 %v853, 7
        %v855 = vsub.s32 0, %v854
        %v856 = vrot.slane %v316, %v855
        %v857 = vlaneseq
        %v858 = vshrl.u32 %v857, 7
        %v859 = vsub.s32 1, %v858
        %v860 = vrot.slane %v316, %v859
        %v863 = vsub.f32 %v856, %v820
        %v864 = vsub.f32 %v860, %v821
        %v865 = vsub.f32 %v856, %v822
        %v866 = vsub.f32 %v860, %v823
        %v867 = vsub.f32 %v856, %v824
        %v868 = vsub.f32 %v860, %v825
        %v869 = vsub.f32 %v856, %v826
        %v870 = vsub.f32 %v860, %v827
        %v871 = vsub.f32 %v856, %v828
        %v872 = vsub.f32 %v860, %v829
        %v873 = vsub.f32 %v856, %v830
        %v874 = vsub.f32 %v860, %v831
        %v875 = vsub.f32 %v856, %v832
        %v876 = vsub.f32 %v860, %v833
        %v877 = vsub.f32 %v856, %v834
        %v878 = vsub.f32 %v860, %v835
        %v879 = vsub.f32 %v856, %v836
        %v880 = vsub.f32 %v860, %v837
        %v881 = vsub.f32 %v856, %v838
        %v882 = vsub.f32 %v860, %v839
        %v883 = vsub.f32 %v856, %v840
        %v884 = vsub.f32 %v860, %v841
        %v885 = vsub.f32 %v856, %v842
        %v886 = vsub.f32 %v860, %v843
        %v887 = vsub.f32 %v856, %v844
        %v888 = vsub.f32 %v860, %v845
        %v889 = vsub.f32 %v856, %v846
        %v890 = vsub.f32 %v860, %v847
        %v891 = vsub.f32 %v856, %v848
        %v892 = vsub.f32 %v860, %v849
        %v893 = vsub.f32 %v856, %v850
        %v894 = vsub.f32 %v860, %v851
        %v895 = vmul.f32 %v459, %v788
        %v896 = vmul.f32 %v461, %v789
        %v897 = vmul.f32 %v463, %v790
        %v898 = vmul.f32 %v465, %v791
        %v899 = vmul.f32 %v469, %v792
        %v900 = vmul.f32 %v471, %v793
        %v901 = vmul.f32 %v473, %v794
        %v902 = vmul.f32 %v475, %v795
        %v903 = vmul.f32 %v479, %v796
        %v904 = vmul.f32 %v481, %v797
        %v905 = vmul.f32 %v483, %v798
        %v906 = vmul.f32 %v485, %v799
        %v907 = vmul.f32 %v489, %v800
        %v908 = vmul.f32 %v491, %v801
        %v909 = vmul.f32 %v493, %v802
        %v910 = vmul.f32 %v495, %v803
        %v911 = vmul.f32 %v499, %v804
        %v912 = vmul.f32 %v501, %v805
        %v913 = vmul.f32 %v503, %v806
        %v914 = vmul.f32 %v505, %v807
        %v915 = vmul.f32 %v509, %v808
        %v916 = vmul.f32 %v511, %v809
        %v917 = vmul.f32 %v513, %v810
        %v918 = vmul.f32 %v515, %v811
        %v919 = vmul.f32 %v519, %v812
        %v920 = vmul.f32 %v521, %v813
        %v921 = vmul.f32 %v523, %v814
        %v922 = vmul.f32 %v525, %v815
        %v923 = vmul.f32 %v529, %v816
        %v924 = vmul.f32 %v531, %v817
        %v925 = vmul.f32 %v533, %v818
        %v926 = vmul.f32 %v535, %v819
        %v927 = vadd.f32 %v895, %v863
        %v928 = vadd.f32 %v896, %v864
        %v929 = vadd.f32 %v897, %v865
        %v930 = vadd.f32 %v898, %v866
        %v931 = vadd.f32 %v899, %v867
        %v932 = vadd.f32 %v900, %v868
        %v933 = vadd.f32 %v901, %v869
        %v934 = vadd.f32 %v902, %v870
        %v935 = vadd.f32 %v903, %v871
        %v936 = vadd.f32 %v904, %v872
        %v937 = vadd.f32 %v905, %v873
        %v938 = vadd.f32 %v906, %v874
        %v939 = vadd.f32 %v907, %v875
        %v940 = vadd.f32 %v908, %v876
        %v941 = vadd.f32 %v909, %v877
        %v942 = vadd.f32 %v910, %v878
        %v943 = vadd.f32 %v911, %v879
        %v944 = vadd.f32 %v912, %v880
        %v945 = vadd.f32 %v913, %v881
        %v946 = vadd.f32 %v914, %v882
        %v947 = vadd.f32 %v915, %v883
        %v948 = vadd.f32 %v916, %v884
        %v949 = vadd.f32 %v917, %v885
        %v950 = vadd.f32 %v918, %v886
        %v951 = vadd.f32 %v919, %v887
        %v952 = vadd.f32 %v920, %v888
        %v953 = vadd.f32 %v921, %v889
        %v954 = vadd.f32 %v922, %v890
        %v955 = vadd.f32 %v923, %v891
        %v956 = vadd.f32 %v924, %v892
        %v957 = vadd.f32 %v925, %v893
        %v958 = vadd.f32 %v926, %v894
        %v959 = vld [vmem:[%s4] sm:$0x1]
        %v960 = vld [vmem:[%s4 + $0x1] sm:$0x1]
        %v961 = vld [vmem:[%s4 + $0x2] sm:$0x1]
        %v962 = vpack.c.bf16 %v929, %v927
        %v963 = vpack.c.bf16 %v930, %v928
        %v964 = vpack.c.bf16 %v933, %v931
        %v965 = vpack.c.bf16 %v934, %v932
        %v966 = vpack.c.bf16 %v937, %v935
        %v967 = vpack.c.bf16 %v938, %v936
        %v968 = vpack.c.bf16 %v941, %v939
        %v969 = vpack.c.bf16 %v942, %v940
        %v970 = vpack.c.bf16 %v945, %v943
        %v971 = vpack.c.bf16 %v946, %v944
        %v972 = vpack.c.bf16 %v949, %v947
        %v973 = vpack.c.bf16 %v950, %v948
        %v974 = vpack.c.bf16 %v953, %v951
        %v975 = vpack.c.bf16 %v954, %v952
        %v976 = vpack.c.bf16 %v957, %v955
        %v977 = vpack.c.bf16 %v958, %v956
        %v978 = vld [vmem:[#allocation8] sm:$0xf]
        %v979 = vld [vmem:[#allocation8 + $0x4] sm:$0xf]
        %v980 = vld [vmem:[#allocation8 + $0x8] sm:$0xf]
        %v981 = vld [vmem:[#allocation8 + $0xc] sm:$0xf]
        %v982 = vld [vmem:[#allocation8 + $0x10] sm:$0xf]
        %v983 = vld [vmem:[#allocation8 + $0x14] sm:$0xf]
        %v984 = vld [vmem:[#allocation8 + $0x18] sm:$0xf]
        %v985 = vld [vmem:[#allocation8 + $0x1c] sm:$0xf]
        %v986 = vld [vmem:[#allocation8 + $0x20] sm:$0xf]
        %v987 = vld [vmem:[#allocation8 + $0x24] sm:$0xf]
        %v988 = vld [vmem:[#allocation8 + $0x28] sm:$0xf]
        %v989 = vld [vmem:[#allocation8 + $0x2c] sm:$0xf]
        %v990 = vld [vmem:[#allocation8 + $0x30] sm:$0xf]
        %v991 = vld [vmem:[#allocation8 + $0x34] sm:$0xf]
        %v992 = vld [vmem:[#allocation8 + $0x38] sm:$0xf]
        %v993 = vld [vmem:[#allocation8 + $0x3c] sm:$0xf]
        %v994 = vld [vmem:[#allocation8 + $0x40] sm:$0xf]
        %v995 = vld [vmem:[#allocation8 + $0x44] sm:$0xf]
        %v996 = vld [vmem:[#allocation8 + $0x48] sm:$0xf]
        %v997 = vld [vmem:[#allocation8 + $0x4c] sm:$0xf]
        %v998 = vld [vmem:[#allocation8 + $0x50] sm:$0xf]
        %v999 = vld [vmem:[#allocation8 + $0x54] sm:$0xf]
        %v1000 = vld [vmem:[#allocation8 + $0x58] sm:$0xf]
        %v1001 = vld [vmem:[#allocation8 + $0x5c] sm:$0xf]
        %v1002 = vld [vmem:[#allocation8 + $0x60] sm:$0xf]
        %v1003 = vld [vmem:[#allocation8 + $0x64] sm:$0xf]
        %v1004 = vld [vmem:[#allocation8 + $0x68] sm:$0xf]
        %v1005 = vld [vmem:[#allocation8 + $0x6c] sm:$0xf]
        %v1006 = vld [vmem:[#allocation8 + $0x70] sm:$0xf]
        %v1007 = vld [vmem:[#allocation8 + $0x74] sm:$0xf]
        %v1008 = vld [vmem:[#allocation8 + $0x78] sm:$0xf]
        %v1009 = vld [vmem:[#allocation8 + $0x7c] sm:$0xf]
        %v1010 = vlaneseq
        %v1011 = vshrl.u32 %v1010, 7
        %v1012 = vsub.s32 0, %v1011
        %v1013 = vrot.slane %v959, %v1012
        %v1046 = vunpack.c.l.b16 %v978
        %v1047 = vunpack.c.l.b16 %v979
        %v1048 = vunpack.c.l.b16 %v980
        %v1049 = vunpack.c.l.b16 %v981
        %v1050 = vunpack.c.l.b16 %v982
        %v1051 = vunpack.c.l.b16 %v983
        %v1052 = vunpack.c.l.b16 %v984
        %v1053 = vunpack.c.l.b16 %v985
        %v1054 = vunpack.c.l.b16 %v986
        %v1055 = vunpack.c.l.b16 %v987
        %v1056 = vunpack.c.l.b16 %v988
        %v1057 = vunpack.c.l.b16 %v989
        %v1058 = vunpack.c.l.b16 %v990
        %v1059 = vunpack.c.l.b16 %v991
        %v1060 = vunpack.c.l.b16 %v992
        %v1061 = vunpack.c.l.b16 %v993
        %v1062 = vunpack.c.l.b16 %v994
        %v1063 = vunpack.c.l.b16 %v995
        %v1064 = vunpack.c.l.b16 %v996
        %v1065 = vunpack.c.l.b16 %v997
        %v1066 = vunpack.c.l.b16 %v998
        %v1067 = vunpack.c.l.b16 %v999
        %v1068 = vunpack.c.l.b16 %v1000
        %v1069 = vunpack.c.l.b16 %v1001
        %v1070 = vunpack.c.l.b16 %v1002
        %v1071 = vunpack.c.l.b16 %v1003
        %v1072 = vunpack.c.l.b16 %v1004
        %v1073 = vunpack.c.l.b16 %v1005
        %v1074 = vunpack.c.l.b16 %v1006
        %v1075 = vunpack.c.l.b16 %v1007
        %v1076 = vunpack.c.l.b16 %v1008
        %v1077 = vunpack.c.l.b16 %v1009
        %v1078 = vpack.c.b16 %v1047, %v1046
        %v1079 = vpack.c.b16 %v1049, %v1048
        %v1080 = vpack.c.b16 %v1051, %v1050
        %v1081 = vpack.c.b16 %v1053, %v1052
        %v1082 = vpack.c.b16 %v1055, %v1054
        %v1083 = vpack.c.b16 %v1057, %v1056
        %v1084 = vpack.c.b16 %v1059, %v1058
        %v1085 = vpack.c.b16 %v1061, %v1060
        %v1086 = vpack.c.b16 %v1063, %v1062
        %v1087 = vpack.c.b16 %v1065, %v1064
        %v1088 = vpack.c.b16 %v1067, %v1066
        %v1089 = vpack.c.b16 %v1069, %v1068
        %v1090 = vpack.c.b16 %v1071, %v1070
        %v1091 = vpack.c.b16 %v1073, %v1072
        %v1092 = vpack.c.b16 %v1075, %v1074
        %v1093 = vpack.c.b16 %v1077, %v1076
        %1110 = vmatprep.subr.bf16.mxu0 0
        %1111 = vmatpush1.bf16.msra.mxu0 %v1085
        %1112 = vmatprep.subr.bf16.mxu0 0
        %1113 = vmatpush1.bf16.msra.mxu0 %v1084
        %1114 = vmatprep.subr.bf16.mxu0 0
        %1115 = vmatpush1.bf16.msra.mxu0 %v1083
        %1116 = vmatprep.subr.bf16.mxu0 0
        %1117 = vmatpush1.bf16.msra.mxu0 %v1082
        %1118 = vmatprep.subr.bf16.mxu0 0
        %1119 = vmatpush1.bf16.msra.mxu0 %v1081
        %1120 = vmatprep.subr.bf16.mxu0 0
        %1121 = vmatpush1.bf16.msra.mxu0 %v1080
        %1122 = vmatprep.subr.bf16.mxu0 0
        %1123 = vmatpush1.bf16.msra.mxu0 %v1079
        %1124 = vmatprep.subr.bf16.mxu0 0
        %1125 = vmatpush1.bf16.msra.mxu0 %v1078
        %1126 = vmatprep.subr.bf16.mxu0 0
        %1127 = vmatpush2.bf16.msra.mxu0 %v1093
        %1128 = vmatprep.subr.bf16.mxu0 0
        %1129 = vmatpush2.bf16.msra.mxu0 %v1092
        %1130 = vmatprep.subr.bf16.mxu0 0
        %1131 = vmatpush2.bf16.msra.mxu0 %v1091
        %1132 = vmatprep.subr.bf16.mxu0 0
        %1133 = vmatpush2.bf16.msra.mxu0 %v1090
        %1134 = vmatprep.subr.bf16.mxu0 0
        %1135 = vmatpush2.bf16.msra.mxu0 %v1089
        %1136 = vmatprep.subr.bf16.mxu0 0
        %1137 = vmatpush2.bf16.msra.mxu0 %v1088
        %1138 = vmatprep.subr.bf16.mxu0 0
        %1139 = vmatpush2.bf16.msra.mxu0 %v1087
        %1140 = vmatprep.subr.bf16.mxu0 0
        %1141 = vmatpush2.bf16.msra.mxu0 %v1086
        %1142 = vmatprep.mubr.bf16.mxu0 %v963
        %1143 = vmatmul.mubr.bf16.gmra.mxu0 %v962
        %v1144 = vpop.f32.mrf.mxu0
        %v1145 = vadd.f32 %v1013, %v1144
        %v1146 = vpop.f32.mrf.mxu0
        %v1147 = vpop.f32.mrf.mxu0
        %v1148 = vadd.f32 %v1013, %v1147
        %v1149 = vpop.f32.mrf.mxu0
        %1150 = vmatprep.mubr.bf16.mxu0 %v965
        %1151 = vmatmul.mubr.bf16.gmra.mxu0 %v964
        %v1152 = vpop.f32.mrf.mxu0
        %v1153 = vadd.f32 %v1013, %v1152
        %v1154 = vpop.f32.mrf.mxu0
        %v1155 = vpop.f32.mrf.mxu0
        %v1156 = vadd.f32 %v1013, %v1155
        %v1157 = vpop.f32.mrf.mxu0
        %1158 = vmatprep.mubr.bf16.mxu0 %v967
        %1159 = vmatmul.mubr.bf16.gmra.mxu0 %v966
        %v1160 = vpop.f32.mrf.mxu0
        %v1161 = vadd.f32 %v1013, %v1160
        %v1162 = vpop.f32.mrf.mxu0
        %v1163 = vpop.f32.mrf.mxu0
        %v1164 = vadd.f32 %v1013, %v1163
        %v1165 = vpop.f32.mrf.mxu0
        %1166 = vmatprep.mubr.bf16.mxu0 %v969
        %1167 = vmatmul.mubr.bf16.gmra.mxu0 %v968
        %v1168 = vpop.f32.mrf.mxu0
        %v1169 = vadd.f32 %v1013, %v1168
        %v1170 = vpop.f32.mrf.mxu0
        %v1171 = vpop.f32.mrf.mxu0
        %v1172 = vadd.f32 %v1013, %v1171
        %v1173 = vpop.f32.mrf.mxu0
        %1174 = vmatprep.mubr.bf16.mxu0 %v971
        %1175 = vmatmul.mubr.bf16.gmra.mxu0 %v970
        %v1176 = vpop.f32.mrf.mxu0
        %v1177 = vadd.f32 %v1013, %v1176
        %v1178 = vpop.f32.mrf.mxu0
        %v1179 = vpop.f32.mrf.mxu0
        %v1180 = vadd.f32 %v1013, %v1179
        %v1181 = vpop.f32.mrf.mxu0
        %1182 = vmatprep.mubr.bf16.mxu0 %v973
        %1183 = vmatmul.mubr.bf16.gmra.mxu0 %v972
        %v1184 = vpop.f32.mrf.mxu0
        %v1185 = vadd.f32 %v1013, %v1184
        %v1186 = vpop.f32.mrf.mxu0
        %v1187 = vpop.f32.mrf.mxu0
        %v1188 = vadd.f32 %v1013, %v1187
        %v1189 = vpop.f32.mrf.mxu0
        %1190 = vmatprep.mubr.bf16.mxu0 %v975
        %1191 = vmatmul.mubr.bf16.gmra.mxu0 %v974
        %v1192 = vpop.f32.mrf.mxu0
        %v1193 = vadd.f32 %v1013, %v1192
        %v1194 = vpop.f32.mrf.mxu0
        %v1195 = vpop.f32.mrf.mxu0
        %v1196 = vadd.f32 %v1013, %v1195
        %v1197 = vpop.f32.mrf.mxu0
        %1198 = vmatprep.mubr.bf16.mxu0 %v977
        %1199 = vmatmul.mubr.bf16.gmra.mxu0 %v976
        %v1200 = vpop.f32.mrf.mxu0
        %v1201 = vadd.f32 %v1013, %v1200
        %v1202 = vpop.f32.mrf.mxu0
        %v1203 = vpop.f32.mrf.mxu0
        %v1204 = vadd.f32 %v1013, %v1203
        %v1205 = vpop.f32.mrf.mxu0
        %1206 = vdwg.mxu0
        %1207 = vadd.xlane.f32.xlu0 %v1145
        %v1208 = vpop.xlane.xlu0 %1207
        %1209 = vadd.xlane.f32.xlu0 %v1148
        %v1210 = vpop.xlane.xlu0 %1209
        %1211 = vadd.xlane.f32.xlu0 %v1153
        %v1212 = vpop.xlane.xlu0 %1211
        %1213 = vadd.xlane.f32.xlu0 %v1156
        %v1214 = vpop.xlane.xlu0 %1213
        %1215 = vadd.xlane.f32.xlu0 %v1161
        %v1216 = vpop.xlane.xlu0 %1215
        %1217 = vadd.xlane.f32.xlu0 %v1164
        %v1218 = vpop.xlane.xlu0 %1217
        %1219 = vadd.xlane.f32.xlu0 %v1169
        %v1220 = vpop.xlane.xlu0 %1219
        %1221 = vadd.xlane.f32.xlu0 %v1172
        %v1222 = vpop.xlane.xlu0 %1221
        %1223 = vadd.xlane.f32.xlu0 %v1177
        %v1224 = vpop.xlane.xlu0 %1223
        %1225 = vadd.xlane.f32.xlu0 %v1180
        %v1226 = vpop.xlane.xlu0 %1225
        %1227 = vadd.xlane.f32.xlu0 %v1185
        %v1228 = vpop.xlane.xlu0 %1227
        %1229 = vadd.xlane.f32.xlu0 %v1188
        %v1230 = vpop.xlane.xlu0 %1229
        %1231 = vadd.xlane.f32.xlu0 %v1193
        %v1232 = vpop.xlane.xlu0 %1231
        %1233 = vadd.xlane.f32.xlu0 %v1196
        %v1234 = vpop.xlane.xlu0 %1233
        %1235 = vadd.xlane.f32.xlu0 %v1201
        %v1236 = vpop.xlane.xlu0 %1235
        %1237 = vadd.xlane.f32.xlu0 %v1204
        %v1238 = vpop.xlane.xlu0 %1237
        %v1239 = vmul.f32 %v1208, 0.0125
        %v1240 = vmul.f32 %v1210, 0.0125
        %v1241 = vmul.f32 %v1212, 0.0125
        %v1242 = vmul.f32 %v1214, 0.0125
        %v1243 = vmul.f32 %v1216, 0.0125
        %v1244 = vmul.f32 %v1218, 0.0125
        %v1245 = vmul.f32 %v1220, 0.0125
        %v1246 = vmul.f32 %v1222, 0.0125
        %v1247 = vmul.f32 %v1224, 0.0125
        %v1248 = vmul.f32 %v1226, 0.0125
        %v1249 = vmul.f32 %v1228, 0.0125
        %v1250 = vmul.f32 %v1230, 0.0125
        %v1251 = vmul.f32 %v1232, 0.0125
        %v1252 = vmul.f32 %v1234, 0.0125
        %v1253 = vmul.f32 %v1236, 0.0125
        %v1254 = vmul.f32 %v1238, 0.0125
        %v1255 = vmul.f32 %v1145, %v1145
        %v1256 = vmul.f32 %v1148, %v1148
        %v1257 = vmul.f32 %v1153, %v1153
        %v1258 = vmul.f32 %v1156, %v1156
        %v1259 = vmul.f32 %v1161, %v1161
        %v1260 = vmul.f32 %v1164, %v1164
        %v1261 = vmul.f32 %v1169, %v1169
        %v1262 = vmul.f32 %v1172, %v1172
        %v1263 = vmul.f32 %v1177, %v1177
        %v1264 = vmul.f32 %v1180, %v1180
        %v1265 = vmul.f32 %v1185, %v1185
        %v1266 = vmul.f32 %v1188, %v1188
        %v1267 = vmul.f32 %v1193, %v1193
        %v1268 = vmul.f32 %v1196, %v1196
        %v1269 = vmul.f32 %v1201, %v1201
        %v1270 = vmul.f32 %v1204, %v1204
        %1271 = vadd.xlane.f32.xlu0 %v1255
        %v1272 = vpop.xlane.xlu0 %1271
        %1273 = vadd.xlane.f32.xlu0 %v1256
        %v1274 = vpop.xlane.xlu0 %1273
        %1275 = vadd.xlane.f32.xlu0 %v1257
        %v1276 = vpop.xlane.xlu0 %1275
        %1277 = vadd.xlane.f32.xlu0 %v1258
        %v1278 = vpop.xlane.xlu0 %1277
        %1279 = vadd.xlane.f32.xlu0 %v1259
        %v1280 = vpop.xlane.xlu0 %1279
        %1281 = vadd.xlane.f32.xlu0 %v1260
        %v1282 = vpop.xlane.xlu0 %1281
        %1283 = vadd.xlane.f32.xlu0 %v1261
        %v1284 = vpop.xlane.xlu0 %1283
        %1285 = vadd.xlane.f32.xlu0 %v1262
        %v1286 = vpop.xlane.xlu0 %1285
        %1287 = vadd.xlane.f32.xlu0 %v1263
        %v1288 = vpop.xlane.xlu0 %1287
        %1289 = vadd.xlane.f32.xlu0 %v1264
        %v1290 = vpop.xlane.xlu0 %1289
        %1291 = vadd.xlane.f32.xlu0 %v1265
        %v1292 = vpop.xlane.xlu0 %1291
        %1293 = vadd.xlane.f32.xlu0 %v1266
        %v1294 = vpop.xlane.xlu0 %1293
        %1295 = vadd.xlane.f32.xlu0 %v1267
        %v1296 = vpop.xlane.xlu0 %1295
        %1297 = vadd.xlane.f32.xlu0 %v1268
        %v1298 = vpop.xlane.xlu0 %1297
        %1299 = vadd.xlane.f32.xlu0 %v1269
        %v1300 = vpop.xlane.xlu0 %1299
        %1301 = vadd.xlane.f32.xlu0 %v1270
        %v1302 = vpop.xlane.xlu0 %1301
        %v1303 = vmul.f32 %v1272, 0.0125
        %v1304 = vmul.f32 %v1274, 0.0125
        %v1305 = vmul.f32 %v1276, 0.0125
        %v1306 = vmul.f32 %v1278, 0.0125
        %v1307 = vmul.f32 %v1280, 0.0125
        %v1308 = vmul.f32 %v1282, 0.0125
        %v1309 = vmul.f32 %v1284, 0.0125
        %v1310 = vmul.f32 %v1286, 0.0125
        %v1311 = vmul.f32 %v1288, 0.0125
        %v1312 = vmul.f32 %v1290, 0.0125
        %v1313 = vmul.f32 %v1292, 0.0125
        %v1314 = vmul.f32 %v1294, 0.0125
        %v1315 = vmul.f32 %v1296, 0.0125
        %v1316 = vmul.f32 %v1298, 0.0125
        %v1317 = vmul.f32 %v1300, 0.0125
        %v1318 = vmul.f32 %v1302, 0.0125
        %v1319 = vmul.f32 %v1239, %v1239
        %v1320 = vmul.f32 %v1240, %v1240
        %v1321 = vmul.f32 %v1241, %v1241
        %v1322 = vmul.f32 %v1242, %v1242
        %v1323 = vmul.f32 %v1243, %v1243
        %v1324 = vmul.f32 %v1244, %v1244
        %v1325 = vmul.f32 %v1245, %v1245
        %v1326 = vmul.f32 %v1246, %v1246
        %v1327 = vmul.f32 %v1247, %v1247
        %v1328 = vmul.f32 %v1248, %v1248
        %v1329 = vmul.f32 %v1249, %v1249
        %v1330 = vmul.f32 %v1250, %v1250
        %v1331 = vmul.f32 %v1251, %v1251
        %v1332 = vmul.f32 %v1252, %v1252
        %v1333 = vmul.f32 %v1253, %v1253
        %v1334 = vmul.f32 %v1254, %v1254
        %v1335 = vsub.f32 %v1303, %v1319
        %v1336 = vsub.f32 %v1304, %v1320
        %v1337 = vsub.f32 %v1305, %v1321
        %v1338 = vsub.f32 %v1306, %v1322
        %v1339 = vsub.f32 %v1307, %v1323
        %v1340 = vsub.f32 %v1308, %v1324
        %v1341 = vsub.f32 %v1309, %v1325
        %v1342 = vsub.f32 %v1310, %v1326
        %v1343 = vsub.f32 %v1311, %v1327
        %v1344 = vsub.f32 %v1312, %v1328
        %v1345 = vsub.f32 %v1313, %v1329
        %v1346 = vsub.f32 %v1314, %v1330
        %v1347 = vsub.f32 %v1315, %v1331
        %v1348 = vsub.f32 %v1316, %v1332
        %v1349 = vsub.f32 %v1317, %v1333
        %v1350 = vsub.f32 %v1318, %v1334
        %v1351 = vmax.f32 %v1335, 0.0
        %v1352 = vmax.f32 %v1336, 0.0
        %v1353 = vmax.f32 %v1337, 0.0
        %v1354 = vmax.f32 %v1338, 0.0
        %v1355 = vmax.f32 %v1339, 0.0
        %v1356 = vmax.f32 %v1340, 0.0
        %v1357 = vmax.f32 %v1341, 0.0
        %v1358 = vmax.f32 %v1342, 0.0
        %v1359 = vmax.f32 %v1343, 0.0
        %v1360 = vmax.f32 %v1344, 0.0
        %v1361 = vmax.f32 %v1345, 0.0
        %v1362 = vmax.f32 %v1346, 0.0
        %v1363 = vmax.f32 %v1347, 0.0
        %v1364 = vmax.f32 %v1348, 0.0
        %v1365 = vmax.f32 %v1349, 0.0
        %v1366 = vmax.f32 %v1350, 0.0
        %v1367 = vadd.f32 %v1351, 1e-05
        %v1368 = vadd.f32 %v1352, 1e-05
        %v1369 = vadd.f32 %v1353, 1e-05
        %v1370 = vadd.f32 %v1354, 1e-05
        %v1371 = vadd.f32 %v1355, 1e-05
        %v1372 = vadd.f32 %v1356, 1e-05
        %v1373 = vadd.f32 %v1357, 1e-05
        %v1374 = vadd.f32 %v1358, 1e-05
        %v1375 = vadd.f32 %v1359, 1e-05
        %v1376 = vadd.f32 %v1360, 1e-05
        %v1377 = vadd.f32 %v1361, 1e-05
        %v1378 = vadd.f32 %v1362, 1e-05
        %v1379 = vadd.f32 %v1363, 1e-05
        %v1380 = vadd.f32 %v1364, 1e-05
        %v1381 = vadd.f32 %v1365, 1e-05
        %v1382 = vadd.f32 %v1366, 1e-05
        %v1383 = vrsqrt.pop %v1367
        %v1384 = vrsqrt.pop %v1368
        %v1385 = vrsqrt.pop %v1369
        %v1386 = vrsqrt.pop %v1370
        %v1387 = vrsqrt.pop %v1371
        %v1388 = vrsqrt.pop %v1372
        %v1389 = vrsqrt.pop %v1373
        %v1390 = vrsqrt.pop %v1374
        %v1391 = vrsqrt.pop %v1375
        %v1392 = vrsqrt.pop %v1376
        %v1393 = vrsqrt.pop %v1377
        %v1394 = vrsqrt.pop %v1378
        %v1395 = vrsqrt.pop %v1379
        %v1396 = vrsqrt.pop %v1380
        %v1397 = vrsqrt.pop %v1381
        %v1398 = vrsqrt.pop %v1382
        %v1399 = vlaneseq
        %v1400 = vshrl.u32 %v1399, 7
        %v1401 = vsub.s32 0, %v1400
        %v1402 = vrot.slane %v960, %v1401
        %v1403 = vmul.f32 %v1383, %v1402
        %v1404 = vmul.f32 %v1384, %v1402
        %v1405 = vmul.f32 %v1385, %v1402
        %v1406 = vmul.f32 %v1386, %v1402
        %v1407 = vmul.f32 %v1387, %v1402
        %v1408 = vmul.f32 %v1388, %v1402
        %v1409 = vmul.f32 %v1389, %v1402
        %v1410 = vmul.f32 %v1390, %v1402
        %v1411 = vmul.f32 %v1391, %v1402
        %v1412 = vmul.f32 %v1392, %v1402
        %v1413 = vmul.f32 %v1393, %v1402
        %v1414 = vmul.f32 %v1394, %v1402
        %v1415 = vmul.f32 %v1395, %v1402
        %v1416 = vmul.f32 %v1396, %v1402
        %v1417 = vmul.f32 %v1397, %v1402
        %v1418 = vmul.f32 %v1398, %v1402
        %v1419 = vmul.f32 %v1239, %v1403
        %v1420 = vmul.f32 %v1240, %v1404
        %v1421 = vmul.f32 %v1241, %v1405
        %v1422 = vmul.f32 %v1242, %v1406
        %v1423 = vmul.f32 %v1243, %v1407
        %v1424 = vmul.f32 %v1244, %v1408
        %v1425 = vmul.f32 %v1245, %v1409
        %v1426 = vmul.f32 %v1246, %v1410
        %v1427 = vmul.f32 %v1247, %v1411
        %v1428 = vmul.f32 %v1248, %v1412
        %v1429 = vmul.f32 %v1249, %v1413
        %v1430 = vmul.f32 %v1250, %v1414
        %v1431 = vmul.f32 %v1251, %v1415
        %v1432 = vmul.f32 %v1252, %v1416
        %v1433 = vmul.f32 %v1253, %v1417
        %v1434 = vmul.f32 %v1254, %v1418
        %v1435 = vlaneseq
        %v1436 = vshrl.u32 %v1435, 7
        %v1437 = vsub.s32 0, %v1436
        %v1438 = vrot.slane %v961, %v1437
        %v1439 = vsub.f32 %v1438, %v1419
        %v1440 = vsub.f32 %v1438, %v1420
        %v1441 = vsub.f32 %v1438, %v1421
        %v1442 = vsub.f32 %v1438, %v1422
        %v1443 = vsub.f32 %v1438, %v1423
        %v1444 = vsub.f32 %v1438, %v1424
        %v1445 = vsub.f32 %v1438, %v1425
        %v1446 = vsub.f32 %v1438, %v1426
        %v1447 = vsub.f32 %v1438, %v1427
        %v1448 = vsub.f32 %v1438, %v1428
        %v1449 = vsub.f32 %v1438, %v1429
        %v1450 = vsub.f32 %v1438, %v1430
        %v1451 = vsub.f32 %v1438, %v1431
        %v1452 = vsub.f32 %v1438, %v1432
        %v1453 = vsub.f32 %v1438, %v1433
        %v1454 = vsub.f32 %v1438, %v1434
        %v1455 = vmul.f32 %v1145, %v1403
        %v1456 = vmul.f32 %v1148, %v1404
        %v1457 = vmul.f32 %v1153, %v1405
        %v1458 = vmul.f32 %v1156, %v1406
        %v1459 = vmul.f32 %v1161, %v1407
        %v1460 = vmul.f32 %v1164, %v1408
        %v1461 = vmul.f32 %v1169, %v1409
        %v1462 = vmul.f32 %v1172, %v1410
        %v1463 = vmul.f32 %v1177, %v1411
        %v1464 = vmul.f32 %v1180, %v1412
        %v1465 = vmul.f32 %v1185, %v1413
        %v1466 = vmul.f32 %v1188, %v1414
        %v1467 = vmul.f32 %v1193, %v1415
        %v1468 = vmul.f32 %v1196, %v1416
        %v1469 = vmul.f32 %v1201, %v1417
        %v1470 = vmul.f32 %v1204, %v1418
        %v1471 = vadd.f32 %v1455, %v1439
        %v1472 = vadd.f32 %v1456, %v1440
        %v1473 = vadd.f32 %v1457, %v1441
        %v1474 = vadd.f32 %v1458, %v1442
        %v1475 = vadd.f32 %v1459, %v1443
        %v1476 = vadd.f32 %v1460, %v1444
        %v1477 = vadd.f32 %v1461, %v1445
        %v1478 = vadd.f32 %v1462, %v1446
        %v1479 = vadd.f32 %v1463, %v1447
        %v1480 = vadd.f32 %v1464, %v1448
        %v1481 = vadd.f32 %v1465, %v1449
        %v1482 = vadd.f32 %v1466, %v1450
        %v1483 = vadd.f32 %v1467, %v1451
        %v1484 = vadd.f32 %v1468, %v1452
        %v1485 = vadd.f32 %v1469, %v1453
        %v1486 = vadd.f32 %v1470, %v1454
        %1487 = vst [vmem:[%s284] sm:$0xff] %v1471
        %1488 = vst [vmem:[%s284 + $0x8] sm:$0xff] %v1472
        %1489 = vst [vmem:[%s284 + $0x10] sm:$0xff] %v1473
        %1490 = vst [vmem:[%s284 + $0x18] sm:$0xff] %v1474
        %1491 = vst [vmem:[%s284 + $0x20] sm:$0xff] %v1475
        %1492 = vst [vmem:[%s284 + $0x28] sm:$0xff] %v1476
        %1493 = vst [vmem:[%s284 + $0x30] sm:$0xff] %v1477
        %1494 = vst [vmem:[%s284 + $0x38] sm:$0xff] %v1478
        %1495 = vst [vmem:[%s284 + $0x40] sm:$0xff] %v1479
        %1496 = vst [vmem:[%s284 + $0x48] sm:$0xff] %v1480
        %1497 = vst [vmem:[%s284 + $0x50] sm:$0xff] %v1481
        %1498 = vst [vmem:[%s284 + $0x58] sm:$0xff] %v1482
        %1499 = vst [vmem:[%s284 + $0x60] sm:$0xff] %v1483
        %1500 = vst [vmem:[%s284 + $0x68] sm:$0xff] %v1484
        %1501 = vst [vmem:[%s284 + $0x70] sm:$0xff] %v1485
        %1502 = vst [vmem:[%s284 + $0x78] sm:$0xff] %v1486
        %s1503 = sand.u32 %s142, 1
        %s1504 = scalar_lea.sflag [#allocation4], %s1503
        %s1505 = sand.u32 %s142, 1
        %s1506 = smul.addr %s1505, 128
        %s1507 = scalar_lea.vmem [#allocation10], %s1506
        // Predicated region
        $region57: #{tpu_custom_call.1} parent=39 // pred_check
          %p1508 = pneg %p152
        $region58: #{tpu_custom_call.1} parent=39 // pred_check_branch
          %1510 = sbr.rel (%p1508) target = $region60
        $region59: #{tpu_custom_call.1} parent=39 // pred_region
          %s1511 = smul.u32 16, %s24
          %s1513 = ssub.s32 2048, 2048
          %1514 = vsyncadd %s1504, %s1513
          %s1515 = smul.addr %s1511, 128
          %s1516 = scalar_lea.hbm %s5, %s1515
          %s1517 = sshll.u32 %s1507, 4
          %s1518 = int_to_ptr.vmem [resolvable:$true] %s1517
          %1523 = dma.vmem_to_hbm [thread:$0]  %s1518, 2048, %s1516, %s1504, 128, 128, 8
        $region60: #{tpu_custom_call.1} parent=39 // pred_fallthru
          _
      $region40: #{tpu_custom_call.1} parent=5 // pred_fallthru
        _
      %p1524 = scmp.le.s32.totalorder 2, %s19
      // Predicated region
      $region61: #{tpu_custom_call.1} parent=5 // pred_check
        %p1525 = pneg %p1524
      $region62: #{tpu_custom_call.1} parent=5 // pred_check_branch
        %1527 = sbr.rel (%p1525) target = $region64
      $region63: #{tpu_custom_call.1} parent=5 // pred_region
        %s1528 = ssub.s32 %s19, 2
        // Predicated region
        $region65: #{tpu_custom_call.1} parent=63 // pred_check
          %p1529 = pneg %p158
        $region66: #{tpu_custom_call.1} parent=63 // pred_check_branch
          %1531 = sbr.rel (%p1529) target = $region68
        $region67: #{tpu_custom_call.1} parent=63 // pred_region
          %s1532 = sand.u32 %s143, 1
          %s1533 = scalar_lea.sflag [#allocation4], %s1532
          %s1534 = sand.u32 %s143, 1
          %s1535 = smul.addr %s1534, 128
          %s1536 = scalar_lea.vmem [#allocation10], %s1535
          %1537 = dma.done %s1533, 2048
        $region68: #{tpu_custom_call.1} parent=63 // pred_fallthru
          _
      $region64: #{tpu_custom_call.1} parent=5 // pred_fallthru
        _
    $region6: #{tpu_custom_call.1} parent=1 // loop_footer
      %s23 = sadd.s32 1, %s19
    $region7: #{tpu_custom_call.1} parent=1 // loop_footer_branch
      %18 = sbr.rel target = $region3
    $region8: #{tpu_custom_call.1} parent=1 // loop_exit
      _
    %1538 = vsyncpa [#allocation3], 1
    %s1539 = scalar_lea.sflag [#allocation3], 1
    %1540 = vsyncpa %s1539, 1
    %1541 = vsyncpa [#allocation6], 1
    %1542 = vsyncpa [#allocation9], 1
    %1543 = vsyncpa [#allocation4], 1
    %s1544 = scalar_lea.sflag [#allocation4], 1
    %1545 = vsyncpa %s1544, 1

</llo_original>
